<compile_context>
chip_gen: v7x
topology: tpu7x:2x2x1
jax: 0.10.0
libtpu: 0.0.40
codegen_flags: <defaults>
</compile_context>

<pallas_src>
import jax
import jax.numpy as jnp
from jax.experimental import pallas as pl
from jax.experimental.pallas import tpu as pltpu


EPS = 1e-3


def _fused_kernel(x_ref, w_ref, g_ref, b_ref, o_ref):
    # x_ref: (Cin, P)   channel-major flattened input (P = N*H*W)
    # w_ref: (Cout, Cin) 1x1 conv weight with x222 scale pre-folded
    # g_ref: (Cout, 1)  batchnorm gamma
    # b_ref: (Cout, 1)  batchnorm beta
    # o_ref: (Cout, P)
    x = x_ref[...]
    w = w_ref[...]

    # 1x1 conv == matmul over channels (MXU), f32 accumulation.
    y = jnp.dot(w, x, preferred_element_type=jnp.float32)        # (Cout, P)

    # BatchNorm2d, training mode: biased batch stats over N*H*W per output
    # channel, computed in one pass (sum & sum of squares), affine folded.
    # NOTE: valid only while the whole P axis lives in this single block.
    p = y.shape[1]
    inv_p = 1.0 / p
    s1 = jnp.sum(y, axis=1, keepdims=True)                       # (Cout, 1)
    s2 = jnp.sum(y * y, axis=1, keepdims=True)                   # (Cout, 1)
    mean = s1 * inv_p
    var = s2 * inv_p - mean * mean
    scale = g_ref[...] * jax.lax.rsqrt(var + EPS)                # (Cout, 1)
    bias = b_ref[...] - mean * scale                             # (Cout, 1)
    o_ref[...] = (y * scale + bias).astype(o_ref.dtype)


def mul_conv_bn(x217, x222, w, gamma, beta):
    """x217: (N, Cin, H, W), x222: (1, Cin, 1, 1), w: (Cout, Cin, 1, 1).
    Returns (N, Cout, H, W), matching the PyTorch module's forward."""
    n, cin, h, wdim = x217.shape
    cout = w.shape[0]
    p = n * h * wdim

    # Channel-major (Cin, P).  For N=1 (the module's case) this is a pure
    # reshape -- no transpose kernel, no extra HBM round-trip.
    if n == 1:
        x2d = x217.reshape(cin, p)
    else:
        x2d = jnp.transpose(x217, (1, 0, 2, 3)).reshape(cin, p)

    # Fold the per-input-channel broadcast scale x222 into the conv weight.
    w2d = w.reshape(cout, cin) * x222.reshape(1, cin)            # (Cout, Cin)
    g2d = gamma.reshape(cout, 1)
    b2d = beta.reshape(cout, 1)

    cost = pl.CostEstimate(
        flops=2 * p * cin * cout,
        transcendentals=cout,
        bytes_accessed=4 * (cin * p + cout * cin + cout * p + 2 * cout),
    )

    out2d = pl.pallas_call(
        _fused_kernel,
        grid=(1,),
        in_specs=[
            pl.BlockSpec((cin, p), lambda i: (0, 0)),
            pl.BlockSpec((cout, cin), lambda i: (0, 0)),
            pl.BlockSpec((cout, 1), lambda i: (0, 0)),
            pl.BlockSpec((cout, 1), lambda i: (0, 0)),
        ],
        out_specs=pl.BlockSpec((cout, p), lambda i: (0, 0)),
        out_shape=jax.ShapeDtypeStruct((cout, p), jnp.float32),
        compiler_params=pltpu.CompilerParams(
            dimension_semantics=("arbitrary",)),
        cost_estimate=cost,
    )(x2d, w2d, g2d, b2d)

    # (Cout, P) -> NCHW.  For N=1 this is again a pure reshape.
    if n == 1:
        return out2d.reshape(1, cout, h, wdim)
    return jnp.transpose(out2d.reshape(cout, n, h, wdim), (1, 0, 2, 3))


def _reference(x217, x222, w, gamma, beta):
    """Pure-JAX reference of the PyTorch forward (training-mode batchnorm)."""
    x = x222 * x217                                       # (N, Cin, H, W)
    y = jax.lax.conv_general_dilated(
        x, w, window_strides=(1, 1), padding="VALID",
        dimension_numbers=("NCHW", "OIHW", "NCHW"))       # (N, Cout, H, W)
    mean = jnp.mean(y, axis=(0, 2, 3), keepdims=True)
    var = jnp.mean((y - mean) ** 2, axis=(0, 2, 3), keepdims=True)
    return (y - mean) * jax.lax.rsqrt(var + EPS) * gamma.reshape(1, -1, 1, 1) \
        + beta.reshape(1, -1, 1, 1)


if __name__ == "__main__":
    key = jax.random.PRNGKey(0)
    k1, k2, k3, k4, k5 = jax.random.split(key, 5)

    N, CIN, COUT, H, W = 1, 768, 192, 14, 14

    x217 = jax.random.normal(k1, (N, CIN, H, W), dtype=jnp.float32)
    x222 = jax.random.normal(k2, (1, CIN, 1, 1), dtype=jnp.float32)

    # Deterministic parameter init (synthetic, not a checkpoint).
    conv_w = jax.random.normal(k3, (COUT, CIN, 1, 1), dtype=jnp.float32) * 0.02
    bn_gamma = 1.0 + 0.1 * jax.random.normal(k4, (COUT,), dtype=jnp.float32)
    bn_beta = 0.1 * jax.random.normal(k5, (COUT,), dtype=jnp.float32)

    out = mul_conv_bn(x217, x222, conv_w, bn_gamma, bn_beta)
    out = jax.block_until_ready(out)

    ref = _reference(x217, x222, conv_w, bn_gamma, bn_beta)
    assert out.shape == (N, COUT, H, W), out.shape
    assert jnp.allclose(out, ref, atol=1e-3, rtol=1e-3), \
        float(jnp.max(jnp.abs(out - ref)))

    print("KERNEL_OK")
</pallas_src>

<mosaic_0001>
module attributes {stable_mosaic.version = 11 : i64} {
  func.func @_fused_kernel(%arg0: i32, %arg1: memref<768x196xf32, #tpu.memory_space<vmem>>, %arg2: memref<192x768xf32, #tpu.memory_space<vmem>>, %arg3: memref<192x1xf32, #tpu.memory_space<vmem>>, %arg4: memref<192x1xf32, #tpu.memory_space<vmem>>, %arg5: memref<192x196xf32, #tpu.memory_space<vmem>>) attributes {dimension_semantics = [#tpu.dimension_semantics<arbitrary>], iteration_bounds = array<i64: 1>, scalar_prefetch = 0 : i64, scratch_operands = 0 : i64, tpu.core_type = #tpu.core_type<tc>, window_params = [{pipeline_mode = #tpu.pipeline_mode<synchronous>, transform_indices = @transform_0, window_bounds = array<i64: 768, 196>}, {pipeline_mode = #tpu.pipeline_mode<synchronous>, transform_indices = @transform_1, window_bounds = array<i64: 192, 768>}, {pipeline_mode = #tpu.pipeline_mode<synchronous>, transform_indices = @transform_2, window_bounds = array<i64: 192, 1>}, {pipeline_mode = #tpu.pipeline_mode<synchronous>, transform_indices = @transform_3, window_bounds = array<i64: 192, 1>}, {pipeline_mode = #tpu.pipeline_mode<synchronous>, transform_indices = @transform_4, window_bounds = array<i64: 192, 196>}]} {
    %c0 = arith.constant 0 : index
    %c0_0 = arith.constant 0 : index
    %0 = vector.load %arg1[%c0, %c0_0] : memref<768x196xf32, #tpu.memory_space<vmem>>, vector<768x196xf32>
    %c0_1 = arith.constant 0 : index
    %c0_2 = arith.constant 0 : index
    %1 = vector.load %arg2[%c0_1, %c0_2] : memref<192x768xf32, #tpu.memory_space<vmem>>, vector<192x768xf32>
    %cst = arith.constant dense<0.000000e+00> : vector<192x196xf32>
    %2 = tpu.matmul %1, %0, %cst {dimension_numbers = #tpu.dot_dimension_numbers<[1], [0], [0], [1], [0, 0, 1, 1], [], []>} : vector<192x768xf32>, vector<768x196xf32>, vector<192x196xf32> -> vector<192x196xf32>
    %cst_3 = arith.constant dense<0.000000e+00> : vector<192xf32>
    %3 = vector.multi_reduction <add>, %2, %cst_3 [1] : vector<192x196xf32> to vector<192xf32>
    %4 = vector.shape_cast %3 : vector<192xf32> to vector<192x1xf32>
    %5 = arith.mulf %2, %2 : vector<192x196xf32>
    %cst_4 = arith.constant dense<0.000000e+00> : vector<192xf32>
    %6 = vector.multi_reduction <add>, %5, %cst_4 [1] : vector<192x196xf32> to vector<192xf32>
    %7 = vector.shape_cast %6 : vector<192xf32> to vector<192x1xf32>
    %cst_5 = arith.constant 0.00510204071 : f32
    %8 = vector.broadcast %cst_5 : f32 to vector<192x1xf32>
    %9 = arith.mulf %4, %8 : vector<192x1xf32>
    %cst_6 = arith.constant 0.00510204071 : f32
    %10 = vector.broadcast %cst_6 : f32 to vector<192x1xf32>
    %11 = arith.mulf %7, %10 : vector<192x1xf32>
    %12 = arith.mulf %9, %9 : vector<192x1xf32>
    %13 = arith.subf %11, %12 : vector<192x1xf32>
    %c0_7 = arith.constant 0 : index
    %c0_8 = arith.constant 0 : index
    %14 = vector.load %arg3[%c0_7, %c0_8] : memref<192x1xf32, #tpu.memory_space<vmem>>, vector<192x1xf32>
    %cst_9 = arith.constant 1.000000e-03 : f32
    %15 = vector.broadcast %cst_9 : f32 to vector<192x1xf32>
    %16 = arith.addf %13, %15 : vector<192x1xf32>
    %17 = math.rsqrt %16 : vector<192x1xf32>
    %18 = arith.mulf %14, %17 : vector<192x1xf32>
    %c0_10 = arith.constant 0 : index
    %c0_11 = arith.constant 0 : index
    %19 = vector.load %arg4[%c0_10, %c0_11] : memref<192x1xf32, #tpu.memory_space<vmem>>, vector<192x1xf32>
    %20 = arith.mulf %9, %18 : vector<192x1xf32>
    %21 = arith.subf %19, %20 : vector<192x1xf32>
    %22 = vector.broadcast %18 : vector<192x1xf32> to vector<192x196xf32>
    %23 = arith.mulf %2, %22 : vector<192x196xf32>
    %24 = vector.broadcast %21 : vector<192x1xf32> to vector<192x196xf32>
    %25 = arith.addf %23, %24 : vector<192x196xf32>
    %c0_12 = arith.constant 0 : index
    %c0_13 = arith.constant 0 : index
    %26 = vector.load %arg5[%c0_12, %c0_13] : memref<192x196xf32, #tpu.memory_space<vmem>>, vector<192x196xf32>
    tpu.vector_store %arg5[%c0_12, %c0_13], %25 {strides = array<i32>} : memref<192x196xf32, #tpu.memory_space<vmem>>, vector<192x196xf32>,
    return
  }
  func.func @transform_0(%arg0: i32) -> (i32, i32) {
    %c0_i32 = arith.constant 0 : i32
    %c0_i32_0 = arith.constant 0 : i32
    %c0_i32_1 = arith.constant 0 : i32
    return %c0_i32, %c0_i32_0 : i32, i32
  }
  func.func @transform_1(%arg0: i32) -> (i32, i32) {
    %c0_i32 = arith.constant 0 : i32
    %c0_i32_0 = arith.constant 0 : i32
    %c0_i32_1 = arith.constant 0 : i32
    return %c0_i32, %c0_i32_0 : i32, i32
  }
  func.func @transform_2(%arg0: i32) -> (i32, i32) {
    %c0_i32 = arith.constant 0 : i32
    %c0_i32_0 = arith.constant 0 : i32
    %c0_i32_1 = arith.constant 0 : i32
    return %c0_i32, %c0_i32_0 : i32, i32
  }
  func.func @transform_3(%arg0: i32) -> (i32, i32) {
    %c0_i32 = arith.constant 0 : i32
    %c0_i32_0 = arith.constant 0 : i32
    %c0_i32_1 = arith.constant 0 : i32
    return %c0_i32, %c0_i32_0 : i32, i32
  }
  func.func @transform_4(%arg0: i32) -> (i32, i32) {
    %c0_i32 = arith.constant 0 : i32
    %c0_i32_0 = arith.constant 0 : i32
    %c0_i32_1 = arith.constant 0 : i32
    return %c0_i32, %c0_i32_0 : i32, i32
  }
}

</mosaic_0001>

<llo_original>
// kernel: tpu_custom_call.1
$region0: #{tpu_custom_call.1}
  #allocation0 [shape = 'u32[]', space=smem, size = 0x4, offset = 0x4, fixed_abs, tag = 'smem constant byte address 0x4 - core index']
  #allocation1 [shape = 'u32[144,128]{1,0:T(1,128)}', space=vmem, size = 0x12000, scoped, tag = 'internal scratch']
  %s0 = inlined_call_operand.vmem [shape: f32[768,196], index: 0, kind: input, shape index: {}]
  %s1 = inlined_call_operand.vmem [shape: f32[192,768], index: 1, kind: input, shape index: {}]
  %s2 = inlined_call_operand.vmem [shape: f32[192,1], index: 2, kind: input, shape index: {}]
  %s3 = inlined_call_operand.vmem [shape: f32[192,1], index: 3, kind: input, shape index: {}]
  %s4 = inlined_call_operand.hbm [shape: f32[192,196], index: 4, kind: output, shape index: {}]
  %s5 = sld [smem:[#allocation0]]
  $region26: #{tpu_custom_call.1} parent=0
    _
  %s7 = ssub.s32 1, %s5
  %s8 = scalar_select 0, %s7, %s5
  $region1: #{tpu_custom_call.1} parent=0
    #allocation2 [shape = 'u8[196608]{0}', space=vmem, size = 0x30000, scoped, tag = 'output window, operand 0, single buffered']
    #allocation3 [shape = 's32[1]{0}', space=sflag, size = 0x4, scoped, tag = 'scoped memory for tpu_custom_call.1']
    %9 = vsyncpa [#allocation3], 0
    // Predicated region
    $region2: #{tpu_custom_call.1} parent=1 // pred_check
      _
    $region3: #{tpu_custom_call.1} parent=1 // pred_check_branch
      %11 = sbr.rel (0) target = $region5
    $region4: #{tpu_custom_call.1} parent=1 // pred_region
      _
    $region5: #{tpu_custom_call.1} parent=1 // pred_fallthru
      _
    // Predicated region
    $region6: #{tpu_custom_call.1} parent=1 // pred_check
      _
    $region7: #{tpu_custom_call.1} parent=1 // pred_check_branch
      %13 = sbr.rel (0) target = $region9
    $region8: #{tpu_custom_call.1} parent=1 // pred_region
      _
    $region9: #{tpu_custom_call.1} parent=1 // pred_fallthru
      _
    // Predicated region
    $region10: #{tpu_custom_call.1} parent=1 // pred_check
      _
    $region11: #{tpu_custom_call.1} parent=1 // pred_check_branch
      %15 = sbr.rel (0) target = $region13
    $region12: #{tpu_custom_call.1} parent=1 // pred_region
      _
    $region13: #{tpu_custom_call.1} parent=1 // pred_fallthru
      _
    // Predicated region
    $region14: #{tpu_custom_call.1} parent=1 // pred_check
      _
    $region15: #{tpu_custom_call.1} parent=1 // pred_check_branch
      %17 = sbr.rel (0) target = $region17
    $region16: #{tpu_custom_call.1} parent=1 // pred_region
      _
    $region17: #{tpu_custom_call.1} parent=1 // pred_fallthru
      _
    %v18 = vld [vmem:[%s0] sm:$0xff]
    %v19 = vld [vmem:[%s0 + $0x8] sm:$0xff]
    %v20 = vld [vmem:[%s0 + $0x10] sm:$0xff]
    %v21 = vld [vmem:[%s0 + $0x18] sm:$0xff]
    %v22 = vld [vmem:[%s0 + $0x20] sm:$0xff]
    %v23 = vld [vmem:[%s0 + $0x28] sm:$0xff]
    %v24 = vld [vmem:[%s0 + $0x30] sm:$0xff]
    %v25 = vld [vmem:[%s0 + $0x38] sm:$0xff]
    %v26 = vld [vmem:[%s0 + $0x40] sm:$0xff]
    %v27 = vld [vmem:[%s0 + $0x48] sm:$0xff]
    %v28 = vld [vmem:[%s0 + $0x50] sm:$0xff]
    %v29 = vld [vmem:[%s0 + $0x58] sm:$0xff]
    %v30 = vld [vmem:[%s0 + $0x60] sm:$0xff]
    %v31 = vld [vmem:[%s0 + $0x68] sm:$0xff]
    %v32 = vld [vmem:[%s0 + $0x70] sm:$0xff]
    %v33 = vld [vmem:[%s0 + $0x78] sm:$0xff]
    %v34 = vld [vmem:[%s0 + $0x80] sm:$0xff]
    %v35 = vld [vmem:[%s0 + $0x88] sm:$0xff]
    %v36 = vld [vmem:[%s0 + $0x90] sm:$0xff]
    %v37 = vld [vmem:[%s0 + $0x98] sm:$0xff]
    %v38 = vld [vmem:[%s0 + $0xa0] sm:$0xff]
    %v39 = vld [vmem:[%s0 + $0xa8] sm:$0xff]
    %v40 = vld [vmem:[%s0 + $0xb0] sm:$0xff]
    %v41 = vld [vmem:[%s0 + $0xb8] sm:$0xff]
    %v42 = vld [vmem:[%s0 + $0xc0] sm:$0xff]
    %v43 = vld [vmem:[%s0 + $0xc8] sm:$0xff]
    %v44 = vld [vmem:[%s0 + $0xd0] sm:$0xff]
    %v45 = vld [vmem:[%s0 + $0xd8] sm:$0xff]
    %v46 = vld [vmem:[%s0 + $0xe0] sm:$0xff]
    %v47 = vld [vmem:[%s0 + $0xe8] sm:$0xff]
    %v48 = vld [vmem:[%s0 + $0xf0] sm:$0xff]
    %v49 = vld [vmem:[%s0 + $0xf8] sm:$0xff]
    %v50 = vld [vmem:[%s0 + $0x100] sm:$0xff]
    %v51 = vld [vmem:[%s0 + $0x108] sm:$0xff]
    %v52 = vld [vmem:[%s0 + $0x110] sm:$0xff]
    %v53 = vld [vmem:[%s0 + $0x118] sm:$0xff]
    %v54 = vld [vmem:[%s0 + $0x120] sm:$0xff]
    %v55 = vld [vmem:[%s0 + $0x128] sm:$0xff]
    %v56 = vld [vmem:[%s0 + $0x130] sm:$0xff]
    %v57 = vld [vmem:[%s0 + $0x138] sm:$0xff]
    %v58 = vld [vmem:[%s0 + $0x140] sm:$0xff]
    %v59 = vld [vmem:[%s0 + $0x148] sm:$0xff]
    %v60 = vld [vmem:[%s0 + $0x150] sm:$0xff]
    %v61 = vld [vmem:[%s0 + $0x158] sm:$0xff]
    %v62 = vld [vmem:[%s0 + $0x160] sm:$0xff]
    %v63 = vld [vmem:[%s0 + $0x168] sm:$0xff]
    %v64 = vld [vmem:[%s0 + $0x170] sm:$0xff]
    %v65 = vld [vmem:[%s0 + $0x178] sm:$0xff]
    %v66 = vld [vmem:[%s0 + $0x180] sm:$0xff]
    %v67 = vld [vmem:[%s0 + $0x188] sm:$0xff]
    %v68 = vld [vmem:[%s0 + $0x190] sm:$0xff]
    %v69 = vld [vmem:[%s0 + $0x198] sm:$0xff]
    %v70 = vld [vmem:[%s0 + $0x1a0] sm:$0xff]
    %v71 = vld [vmem:[%s0 + $0x1a8] sm:$0xff]
    %v72 = vld [vmem:[%s0 + $0x1b0] sm:$0xff]
    %v73 = vld [vmem:[%s0 + $0x1b8] sm:$0xff]
    %v74 = vld [vmem:[%s0 + $0x1c0] sm:$0xff]
    %v75 = vld [vmem:[%s0 + $0x1c8] sm:$0xff]
    %v76 = vld [vmem:[%s0 + $0x1d0] sm:$0xff]
    %v77 = vld [vmem:[%s0 + $0x1d8] sm:$0xff]
    %v78 = vld [vmem:[%s0 + $0x1e0] sm:$0xff]
    %v79 = vld [vmem:[%s0 + $0x1e8] sm:$0xff]
    %v80 = vld [vmem:[%s0 + $0x1f0] sm:$0xff]
    %v81 = vld [vmem:[%s0 + $0x1f8] sm:$0xff]
    %v82 = vld [vmem:[%s0 + $0x200] sm:$0xff]
    %v83 = vld [vmem:[%s0 + $0x208] sm:$0xff]
    %v84 = vld [vmem:[%s0 + $0x210] sm:$0xff]
    %v85 = vld [vmem:[%s0 + $0x218] sm:$0xff]
    %v86 = vld [vmem:[%s0 + $0x220] sm:$0xff]
    %v87 = vld [vmem:[%s0 + $0x228] sm:$0xff]
    %v88 = vld [vmem:[%s0 + $0x230] sm:$0xff]
    %v89 = vld [vmem:[%s0 + $0x238] sm:$0xff]
    %v90 = vld [vmem:[%s0 + $0x240] sm:$0xff]
    %v91 = vld [vmem:[%s0 + $0x248] sm:$0xff]
    %v92 = vld [vmem:[%s0 + $0x250] sm:$0xff]
    %v93 = vld [vmem:[%s0 + $0x258] sm:$0xff]
    %v94 = vld [vmem:[%s0 + $0x260] sm:$0xff]
    %v95 = vld [vmem:[%s0 + $0x268] sm:$0xff]
    %v96 = vld [vmem:[%s0 + $0x270] sm:$0xff]
    %v97 = vld [vmem:[%s0 + $0x278] sm:$0xff]
    %v98 = vld [vmem:[%s0 + $0x280] sm:$0xff]
    %v99 = vld [vmem:[%s0 + $0x288] sm:$0xff]
    %v100 = vld [vmem:[%s0 + $0x290] sm:$0xff]
    %v101 = vld [vmem:[%s0 + $0x298] sm:$0xff]
    %v102 = vld [vmem:[%s0 + $0x2a0] sm:$0xff]
    %v103 = vld [vmem:[%s0 + $0x2a8] sm:$0xff]
    %v104 = vld [vmem:[%s0 + $0x2b0] sm:$0xff]
    %v105 = vld [vmem:[%s0 + $0x2b8] sm:$0xff]
    %v106 = vld [vmem:[%s0 + $0x2c0] sm:$0xff]
    %v107 = vld [vmem:[%s0 + $0x2c8] sm:$0xff]
    %v108 = vld [vmem:[%s0 + $0x2d0] sm:$0xff]
    %v109 = vld [vmem:[%s0 + $0x2d8] sm:$0xff]
    %v110 = vld [vmem:[%s0 + $0x2e0] sm:$0xff]
    %v111 = vld [vmem:[%s0 + $0x2e8] sm:$0xff]
    %v112 = vld [vmem:[%s0 + $0x2f0] sm:$0xff]
    %v113 = vld [vmem:[%s0 + $0x2f8] sm:$0xff]
    %v114 = vld [vmem:[%s0 + $0x300] sm:$0xff]
    %v115 = vld [vmem:[%s0 + $0x308] sm:$0xff]
    %v116 = vld [vmem:[%s0 + $0x310] sm:$0xff]
    %v117 = vld [vmem:[%s0 + $0x318] sm:$0xff]
    %v118 = vld [vmem:[%s0 + $0x320] sm:$0xff]
    %v119 = vld [vmem:[%s0 + $0x328] sm:$0xff]
    %v120 = vld [vmem:[%s0 + $0x330] sm:$0xff]
    %v121 = vld [vmem:[%s0 + $0x338] sm:$0xff]
    %v122 = vld [vmem:[%s0 + $0x340] sm:$0xff]
    %v123 = vld [vmem:[%s0 + $0x348] sm:$0xff]
    %v124 = vld [vmem:[%s0 + $0x350] sm:$0xff]
    %v125 = vld [vmem:[%s0 + $0x358] sm:$0xff]
    %v126 = vld [vmem:[%s0 + $0x360] sm:$0xff]
    %v127 = vld [vmem:[%s0 + $0x368] sm:$0xff]
    %v128 = vld [vmem:[%s0 + $0x370] sm:$0xff]
    %v129 = vld [vmem:[%s0 + $0x378] sm:$0xff]
    %v130 = vld [vmem:[%s0 + $0x380] sm:$0xff]
    %v131 = vld [vmem:[%s0 + $0x388] sm:$0xff]
    %v132 = vld [vmem:[%s0 + $0x390] sm:$0xff]
    %v133 = vld [vmem:[%s0 + $0x398] sm:$0xff]
    %v134 = vld [vmem:[%s0 + $0x3a0] sm:$0xff]
    %v135 = vld [vmem:[%s0 + $0x3a8] sm:$0xff]
    %v136 = vld [vmem:[%s0 + $0x3b0] sm:$0xff]
    %v137 = vld [vmem:[%s0 + $0x3b8] sm:$0xff]
    %v138 = vld [vmem:[%s0 + $0x3c0] sm:$0xff]
    %v139 = vld [vmem:[%s0 + $0x3c8] sm:$0xff]
    %v140 = vld [vmem:[%s0 + $0x3d0] sm:$0xff]
    %v141 = vld [vmem:[%s0 + $0x3d8] sm:$0xff]
    %v142 = vld [vmem:[%s0 + $0x3e0] sm:$0xff]
    %v143 = vld [vmem:[%s0 + $0x3e8] sm:$0xff]
    %v144 = vld [vmem:[%s0 + $0x3f0] sm:$0xff]
    %v145 = vld [vmem:[%s0 + $0x3f8] sm:$0xff]
    %v146 = vld [vmem:[%s0 + $0x400] sm:$0xff]
    %v147 = vld [vmem:[%s0 + $0x408] sm:$0xff]
    %v148 = vld [vmem:[%s0 + $0x410] sm:$0xff]
    %v149 = vld [vmem:[%s0 + $0x418] sm:$0xff]
    %v150 = vld [vmem:[%s0 + $0x420] sm:$0xff]
    %v151 = vld [vmem:[%s0 + $0x428] sm:$0xff]
    %v152 = vld [vmem:[%s0 + $0x430] sm:$0xff]
    %v153 = vld [vmem:[%s0 + $0x438] sm:$0xff]
    %v154 = vld [vmem:[%s0 + $0x440] sm:$0xff]
    %v155 = vld [vmem:[%s0 + $0x448] sm:$0xff]
    %v156 = vld [vmem:[%s0 + $0x450] sm:$0xff]
    %v157 = vld [vmem:[%s0 + $0x458] sm:$0xff]
    %v158 = vld [vmem:[%s0 + $0x460] sm:$0xff]
    %v159 = vld [vmem:[%s0 + $0x468] sm:$0xff]
    %v160 = vld [vmem:[%s0 + $0x470] sm:$0xff]
    %v161 = vld [vmem:[%s0 + $0x478] sm:$0xff]
    %v162 = vld [vmem:[%s0 + $0x480] sm:$0xff]
    %v163 = vld [vmem:[%s0 + $0x488] sm:$0xff]
    %v164 = vld [vmem:[%s0 + $0x490] sm:$0xff]
    %v165 = vld [vmem:[%s0 + $0x498] sm:$0xff]
    %v166 = vld [vmem:[%s0 + $0x4a0] sm:$0xff]
    %v167 = vld [vmem:[%s0 + $0x4a8] sm:$0xff]
    %v168 = vld [vmem:[%s0 + $0x4b0] sm:$0xff]
    %v169 = vld [vmem:[%s0 + $0x4b8] sm:$0xff]
    %v170 = vld [vmem:[%s0 + $0x4c0] sm:$0xff]
    %v171 = vld [vmem:[%s0 + $0x4c8] sm:$0xff]
    %v172 = vld [vmem:[%s0 + $0x4d0] sm:$0xff]
    %v173 = vld [vmem:[%s0 + $0x4d8] sm:$0xff]
    %v174 = vld [vmem:[%s0 + $0x4e0] sm:$0xff]
    %v175 = vld [vmem:[%s0 + $0x4e8] sm:$0xff]
    %v176 = vld [vmem:[%s0 + $0x4f0] sm:$0xff]
    %v177 = vld [vmem:[%s0 + $0x4f8] sm:$0xff]
    %v178 = vld [vmem:[%s0 + $0x500] sm:$0xff]
    %v179 = vld [vmem:[%s0 + $0x508] sm:$0xff]
    %v180 = vld [vmem:[%s0 + $0x510] sm:$0xff]
    %v181 = vld [vmem:[%s0 + $0x518] sm:$0xff]
    %v182 = vld [vmem:[%s0 + $0x520] sm:$0xff]
    %v183 = vld [vmem:[%s0 + $0x528] sm:$0xff]
    %v184 = vld [vmem:[%s0 + $0x530] sm:$0xff]
    %v185 = vld [vmem:[%s0 + $0x538] sm:$0xff]
    %v186 = vld [vmem:[%s0 + $0x540] sm:$0xff]
    %v187 = vld [vmem:[%s0 + $0x548] sm:$0xff]
    %v188 = vld [vmem:[%s0 + $0x550] sm:$0xff]
    %v189 = vld [vmem:[%s0 + $0x558] sm:$0xff]
    %v190 = vld [vmem:[%s0 + $0x560] sm:$0xff]
    %v191 = vld [vmem:[%s0 + $0x568] sm:$0xff]
    %v192 = vld [vmem:[%s0 + $0x570] sm:$0xff]
    %v193 = vld [vmem:[%s0 + $0x578] sm:$0xff]
    %v194 = vld [vmem:[%s0 + $0x580] sm:$0xff]
    %v195 = vld [vmem:[%s0 + $0x588] sm:$0xff]
    %v196 = vld [vmem:[%s0 + $0x590] sm:$0xff]
    %v197 = vld [vmem:[%s0 + $0x598] sm:$0xff]
    %v198 = vld [vmem:[%s0 + $0x5a0] sm:$0xff]
    %v199 = vld [vmem:[%s0 + $0x5a8] sm:$0xff]
    %v200 = vld [vmem:[%s0 + $0x5b0] sm:$0xff]
    %v201 = vld [vmem:[%s0 + $0x5b8] sm:$0xff]
    %v202 = vld [vmem:[%s0 + $0x5c0] sm:$0xff]
    %v203 = vld [vmem:[%s0 + $0x5c8] sm:$0xff]
    %v204 = vld [vmem:[%s0 + $0x5d0] sm:$0xff]
    %v205 = vld [vmem:[%s0 + $0x5d8] sm:$0xff]
    %v206 = vld [vmem:[%s0 + $0x5e0] sm:$0xff]
    %v207 = vld [vmem:[%s0 + $0x5e8] sm:$0xff]
    %v208 = vld [vmem:[%s0 + $0x5f0] sm:$0xff]
    %v209 = vld [vmem:[%s0 + $0x5f8] sm:$0xff]
    %v210 = vld [vmem:[%s1] sm:$0xff]
    %v211 = vld [vmem:[%s1 + $0x8] sm:$0xff]
    %v212 = vld [vmem:[%s1 + $0x10] sm:$0xff]
    %v213 = vld [vmem:[%s1 + $0x18] sm:$0xff]
    %v214 = vld [vmem:[%s1 + $0x20] sm:$0xff]
    %v215 = vld [vmem:[%s1 + $0x28] sm:$0xff]
    %v216 = vld [vmem:[%s1 + $0x30] sm:$0xff]
    %v217 = vld [vmem:[%s1 + $0x38] sm:$0xff]
    %v218 = vld [vmem:[%s1 + $0x40] sm:$0xff]
    %v219 = vld [vmem:[%s1 + $0x48] sm:$0xff]
    %v220 = vld [vmem:[%s1 + $0x50] sm:$0xff]
    %v221 = vld [vmem:[%s1 + $0x58] sm:$0xff]
    %v222 = vld [vmem:[%s1 + $0x60] sm:$0xff]
    %v223 = vld [vmem:[%s1 + $0x68] sm:$0xff]
    %v224 = vld [vmem:[%s1 + $0x70] sm:$0xff]
    %v225 = vld [vmem:[%s1 + $0x78] sm:$0xff]
    %v226 = vld [vmem:[%s1 + $0x80] sm:$0xff]
    %v227 = vld [vmem:[%s1 + $0x88] sm:$0xff]
    %v228 = vld [vmem:[%s1 + $0x90] sm:$0xff]
    %v229 = vld [vmem:[%s1 + $0x98] sm:$0xff]
    %v230 = vld [vmem:[%s1 + $0xa0] sm:$0xff]
    %v231 = vld [vmem:[%s1 + $0xa8] sm:$0xff]
    %v232 = vld [vmem:[%s1 + $0xb0] sm:$0xff]
    %v233 = vld [vmem:[%s1 + $0xb8] sm:$0xff]
    %v234 = vld [vmem:[%s1 + $0xc0] sm:$0xff]
    %v235 = vld [vmem:[%s1 + $0xc8] sm:$0xff]
    %v236 = vld [vmem:[%s1 + $0xd0] sm:$0xff]
    %v237 = vld [vmem:[%s1 + $0xd8] sm:$0xff]
    %v238 = vld [vmem:[%s1 + $0xe0] sm:$0xff]
    %v239 = vld [vmem:[%s1 + $0xe8] sm:$0xff]
    %v240 = vld [vmem:[%s1 + $0xf0] sm:$0xff]
    %v241 = vld [vmem:[%s1 + $0xf8] sm:$0xff]
    %v242 = vld [vmem:[%s1 + $0x100] sm:$0xff]
    %v243 = vld [vmem:[%s1 + $0x108] sm:$0xff]
    %v244 = vld [vmem:[%s1 + $0x110] sm:$0xff]
    %v245 = vld [vmem:[%s1 + $0x118] sm:$0xff]
    %v246 = vld [vmem:[%s1 + $0x120] sm:$0xff]
    %v247 = vld [vmem:[%s1 + $0x128] sm:$0xff]
    %v248 = vld [vmem:[%s1 + $0x130] sm:$0xff]
    %v249 = vld [vmem:[%s1 + $0x138] sm:$0xff]
    %v250 = vld [vmem:[%s1 + $0x140] sm:$0xff]
    %v251 = vld [vmem:[%s1 + $0x148] sm:$0xff]
    %v252 = vld [vmem:[%s1 + $0x150] sm:$0xff]
    %v253 = vld [vmem:[%s1 + $0x158] sm:$0xff]
    %v254 = vld [vmem:[%s1 + $0x160] sm:$0xff]
    %v255 = vld [vmem:[%s1 + $0x168] sm:$0xff]
    %v256 = vld [vmem:[%s1 + $0x170] sm:$0xff]
    %v257 = vld [vmem:[%s1 + $0x178] sm:$0xff]
    %v258 = vld [vmem:[%s1 + $0x180] sm:$0xff]
    %v259 = vld [vmem:[%s1 + $0x188] sm:$0xff]
    %v260 = vld [vmem:[%s1 + $0x190] sm:$0xff]
    %v261 = vld [vmem:[%s1 + $0x198] sm:$0xff]
    %v262 = vld [vmem:[%s1 + $0x1a0] sm:$0xff]
    %v263 = vld [vmem:[%s1 + $0x1a8] sm:$0xff]
    %v264 = vld [vmem:[%s1 + $0x1b0] sm:$0xff]
    %v265 = vld [vmem:[%s1 + $0x1b8] sm:$0xff]
    %v266 = vld [vmem:[%s1 + $0x1c0] sm:$0xff]
    %v267 = vld [vmem:[%s1 + $0x1c8] sm:$0xff]
    %v268 = vld [vmem:[%s1 + $0x1d0] sm:$0xff]
    %v269 = vld [vmem:[%s1 + $0x1d8] sm:$0xff]
    %v270 = vld [vmem:[%s1 + $0x1e0] sm:$0xff]
    %v271 = vld [vmem:[%s1 + $0x1e8] sm:$0xff]
    %v272 = vld [vmem:[%s1 + $0x1f0] sm:$0xff]
    %v273 = vld [vmem:[%s1 + $0x1f8] sm:$0xff]
    %v274 = vld [vmem:[%s1 + $0x200] sm:$0xff]
    %v275 = vld [vmem:[%s1 + $0x208] sm:$0xff]
    %v276 = vld [vmem:[%s1 + $0x210] sm:$0xff]
    %v277 = vld [vmem:[%s1 + $0x218] sm:$0xff]
    %v278 = vld [vmem:[%s1 + $0x220] sm:$0xff]
    %v279 = vld [vmem:[%s1 + $0x228] sm:$0xff]
    %v280 = vld [vmem:[%s1 + $0x230] sm:$0xff]
    %v281 = vld [vmem:[%s1 + $0x238] sm:$0xff]
    %v282 = vld [vmem:[%s1 + $0x240] sm:$0xff]
    %v283 = vld [vmem:[%s1 + $0x248] sm:$0xff]
    %v284 = vld [vmem:[%s1 + $0x250] sm:$0xff]
    %v285 = vld [vmem:[%s1 + $0x258] sm:$0xff]
    %v286 = vld [vmem:[%s1 + $0x260] sm:$0xff]
    %v287 = vld [vmem:[%s1 + $0x268] sm:$0xff]
    %v288 = vld [vmem:[%s1 + $0x270] sm:$0xff]
    %v289 = vld [vmem:[%s1 + $0x278] sm:$0xff]
    %v290 = vld [vmem:[%s1 + $0x280] sm:$0xff]
    %v291 = vld [vmem:[%s1 + $0x288] sm:$0xff]
    %v292 = vld [vmem:[%s1 + $0x290] sm:$0xff]
    %v293 = vld [vmem:[%s1 + $0x298] sm:$0xff]
    %v294 = vld [vmem:[%s1 + $0x2a0] sm:$0xff]
    %v295 = vld [vmem:[%s1 + $0x2a8] sm:$0xff]
    %v296 = vld [vmem:[%s1 + $0x2b0] sm:$0xff]
    %v297 = vld [vmem:[%s1 + $0x2b8] sm:$0xff]
    %v298 = vld [vmem:[%s1 + $0x2c0] sm:$0xff]
    %v299 = vld [vmem:[%s1 + $0x2c8] sm:$0xff]
    %v300 = vld [vmem:[%s1 + $0x2d0] sm:$0xff]
    %v301 = vld [vmem:[%s1 + $0x2d8] sm:$0xff]
    %v302 = vld [vmem:[%s1 + $0x2e0] sm:$0xff]
    %v303 = vld [vmem:[%s1 + $0x2e8] sm:$0xff]
    %v304 = vld [vmem:[%s1 + $0x2f0] sm:$0xff]
    %v305 = vld [vmem:[%s1 + $0x2f8] sm:$0xff]
    %v306 = vld [vmem:[%s1 + $0x300] sm:$0xff]
    %v307 = vld [vmem:[%s1 + $0x308] sm:$0xff]
    %v308 = vld [vmem:[%s1 + $0x310] sm:$0xff]
    %v309 = vld [vmem:[%s1 + $0x318] sm:$0xff]
    %v310 = vld [vmem:[%s1 + $0x320] sm:$0xff]
    %v311 = vld [vmem:[%s1 + $0x328] sm:$0xff]
    %v312 = vld [vmem:[%s1 + $0x330] sm:$0xff]
    %v313 = vld [vmem:[%s1 + $0x338] sm:$0xff]
    %v314 = vld [vmem:[%s1 + $0x340] sm:$0xff]
    %v315 = vld [vmem:[%s1 + $0x348] sm:$0xff]
    %v316 = vld [vmem:[%s1 + $0x350] sm:$0xff]
    %v317 = vld [vmem:[%s1 + $0x358] sm:$0xff]
    %v318 = vld [vmem:[%s1 + $0x360] sm:$0xff]
    %v319 = vld [vmem:[%s1 + $0x368] sm:$0xff]
    %v320 = vld [vmem:[%s1 + $0x370] sm:$0xff]
    %v321 = vld [vmem:[%s1 + $0x378] sm:$0xff]
    %v322 = vld [vmem:[%s1 + $0x380] sm:$0xff]
    %v323 = vld [vmem:[%s1 + $0x388] sm:$0xff]
    %v324 = vld [vmem:[%s1 + $0x390] sm:$0xff]
    %v325 = vld [vmem:[%s1 + $0x398] sm:$0xff]
    %v326 = vld [vmem:[%s1 + $0x3a0] sm:$0xff]
    %v327 = vld [vmem:[%s1 + $0x3a8] sm:$0xff]
    %v328 = vld [vmem:[%s1 + $0x3b0] sm:$0xff]
    %v329 = vld [vmem:[%s1 + $0x3b8] sm:$0xff]
    %v330 = vld [vmem:[%s1 + $0x3c0] sm:$0xff]
    %v331 = vld [vmem:[%s1 + $0x3c8] sm:$0xff]
    %v332 = vld [vmem:[%s1 + $0x3d0] sm:$0xff]
    %v333 = vld [vmem:[%s1 + $0x3d8] sm:$0xff]
    %v334 = vld [vmem:[%s1 + $0x3e0] sm:$0xff]
    %v335 = vld [vmem:[%s1 + $0x3e8] sm:$0xff]
    %v336 = vld [vmem:[%s1 + $0x3f0] sm:$0xff]
    %v337 = vld [vmem:[%s1 + $0x3f8] sm:$0xff]
    %v338 = vld [vmem:[%s1 + $0x400] sm:$0xff]
    %v339 = vld [vmem:[%s1 + $0x408] sm:$0xff]
    %v340 = vld [vmem:[%s1 + $0x410] sm:$0xff]
    %v341 = vld [vmem:[%s1 + $0x418] sm:$0xff]
    %v342 = vld [vmem:[%s1 + $0x420] sm:$0xff]
    %v343 = vld [vmem:[%s1 + $0x428] sm:$0xff]
    %v344 = vld [vmem:[%s1 + $0x430] sm:$0xff]
    %v345 = vld [vmem:[%s1 + $0x438] sm:$0xff]
    %v346 = vld [vmem:[%s1 + $0x440] sm:$0xff]
    %v347 = vld [vmem:[%s1 + $0x448] sm:$0xff]
    %v348 = vld [vmem:[%s1 + $0x450] sm:$0xff]
    %v349 = vld [vmem:[%s1 + $0x458] sm:$0xff]
    %v350 = vld [vmem:[%s1 + $0x460] sm:$0xff]
    %v351 = vld [vmem:[%s1 + $0x468] sm:$0xff]
    %v352 = vld [vmem:[%s1 + $0x470] sm:$0xff]
    %v353 = vld [vmem:[%s1 + $0x478] sm:$0xff]
    %354 = vmatprep.subr.mxu0 %v19
    %355 = vmatpush1.msra.mxu0 %v18
    %356 = vmatprep.subr.mxu0 %v21
    %357 = vmatpush1.msra.mxu0 %v20
    %358 = vmatprep.subr.mxu0 %v23
    %359 = vmatpush1.msra.mxu0 %v22
    %360 = vmatprep.subr.mxu0 %v25
    %361 = vmatpush1.msra.mxu0 %v24
    %362 = vmatprep.subr.mxu0 %v27
    %363 = vmatpush1.msra.mxu0 %v26
    %364 = vmatprep.subr.mxu0 %v29
    %365 = vmatpush1.msra.mxu0 %v28
    %366 = vmatprep.subr.mxu0 %v31
    %367 = vmatpush1.msra.mxu0 %v30
    %368 = vmatprep.subr.mxu0 %v33
    %369 = vmatpush1.msra.mxu0 %v32
    %370 = vmatprep.subr.mxu0 %v35
    %371 = vmatpush1.msra.mxu0 %v34
    %372 = vmatprep.subr.mxu0 %v37
    %373 = vmatpush1.msra.mxu0 %v36
    %374 = vmatprep.subr.mxu0 %v39
    %375 = vmatpush1.msra.mxu0 %v38
    %376 = vmatprep.subr.mxu0 %v41
    %377 = vmatpush1.msra.mxu0 %v40
    %378 = vmatprep.subr.mxu0 %v43
    %379 = vmatpush1.msra.mxu0 %v42
    %380 = vmatprep.subr.mxu0 %v45
    %381 = vmatpush1.msra.mxu0 %v44
    %382 = vmatprep.subr.mxu0 %v47
    %383 = vmatpush1.msra.mxu0 %v46
    %384 = vmatprep.subr.mxu0 %v49
    %385 = vmatpush1.msra.mxu0 %v48
    %386 = vmatprep.subr.mxu0 %v51
    %387 = vmatpush1.msra.mxu0 %v50
    %388 = vmatprep.subr.mxu0 %v53
    %389 = vmatpush1.msra.mxu0 %v52
    %390 = vmatprep.subr.mxu0 %v55
    %391 = vmatpush1.msra.mxu0 %v54
    %392 = vmatprep.subr.mxu0 %v57
    %393 = vmatpush1.msra.mxu0 %v56
    %394 = vmatprep.subr.mxu0 %v59
    %395 = vmatpush1.msra.mxu0 %v58
    %396 = vmatprep.subr.mxu0 %v61
    %397 = vmatpush1.msra.mxu0 %v60
    %398 = vmatprep.subr.mxu0 %v63
    %399 = vmatpush1.msra.mxu0 %v62
    %400 = vmatprep.subr.mxu0 %v65
    %401 = vmatpush1.msra.mxu0 %v64
    %402 = vmatprep.subr.mxu0 %v67
    %403 = vmatpush1.msra.mxu0 %v66
    %404 = vmatprep.subr.mxu0 %v69
    %405 = vmatpush1.msra.mxu0 %v68
    %406 = vmatprep.subr.mxu0 %v71
    %407 = vmatpush1.msra.mxu0 %v70
    %408 = vmatprep.subr.mxu0 %v73
    %409 = vmatpush1.msra.mxu0 %v72
    %410 = vmatprep.subr.mxu0 %v75
    %411 = vmatpush1.msra.mxu0 %v74
    %412 = vmatprep.subr.mxu0 %v77
    %413 = vmatpush1.msra.mxu0 %v76
    %414 = vmatprep.subr.mxu0 %v79
    %415 = vmatpush1.msra.mxu0 %v78
    %416 = vmatprep.subr.mxu0 %v81
    %417 = vmatpush1.msra.mxu0 %v80
    %418 = vmatprep.mubr.f32.mxu0 %v211
    %419 = vmatmul.mubr.f32.gmra.mrb[0].mxu0 %v210
    %v420 = vpop.f32.mrb[0].mxu0
    %v421 = vadd.f32 0.0, %v420
    %v422 = vpop.f32.mrb[0].mxu0
    %v423 = vadd.f32 0.0, %v422
    %424 = vmatprep.mubr.f32.mxu0 %v217
    %425 = vmatmul.mubr.f32.gmra.mrb[0].mxu0 %v216
    %v426 = vpop.f32.mrb[0].mxu0
    %v427 = vadd.f32 0.0, %v426
    %v428 = vpop.f32.mrb[0].mxu0
    %v429 = vadd.f32 0.0, %v428
    %430 = vmatprep.mubr.f32.mxu0 %v223
    %431 = vmatmul.mubr.f32.gmra.mrb[0].mxu0 %v222
    %v432 = vpop.f32.mrb[0].mxu0
    %v433 = vadd.f32 0.0, %v432
    %v434 = vpop.f32.mrb[0].mxu0
    %v435 = vadd.f32 0.0, %v434
    %436 = vmatprep.mubr.f32.mxu0 %v229
    %437 = vmatmul.mubr.f32.gmra.mrb[0].mxu0 %v228
    %v438 = vpop.f32.mrb[0].mxu0
    %v439 = vadd.f32 0.0, %v438
    %v440 = vpop.f32.mrb[0].mxu0
    %v441 = vadd.f32 0.0, %v440
    %442 = vmatprep.mubr.f32.mxu0 %v235
    %443 = vmatmul.mubr.f32.gmra.mrb[0].mxu0 %v234
    %v444 = vpop.f32.mrb[0].mxu0
    %v445 = vadd.f32 0.0, %v444
    %v446 = vpop.f32.mrb[0].mxu0
    %v447 = vadd.f32 0.0, %v446
    %448 = vmatprep.mubr.f32.mxu0 %v241
    %449 = vmatmul.mubr.f32.gmra.mrb[0].mxu0 %v240
    %v450 = vpop.f32.mrb[0].mxu0
    %v451 = vadd.f32 0.0, %v450
    %v452 = vpop.f32.mrb[0].mxu0
    %v453 = vadd.f32 0.0, %v452
    %454 = vmatprep.mubr.f32.mxu0 %v247
    %455 = vmatmul.mubr.f32.gmra.mrb[0].mxu0 %v246
    %v456 = vpop.f32.mrb[0].mxu0
    %v457 = vadd.f32 0.0, %v456
    %v458 = vpop.f32.mrb[0].mxu0
    %v459 = vadd.f32 0.0, %v458
    %460 = vmatprep.mubr.f32.mxu0 %v253
    %461 = vmatmul.mubr.f32.gmra.mrb[0].mxu0 %v252
    %v462 = vpop.f32.mrb[0].mxu0
    %v463 = vadd.f32 0.0, %v462
    %v464 = vpop.f32.mrb[0].mxu0
    %v465 = vadd.f32 0.0, %v464
    %466 = vmatprep.mubr.f32.mxu0 %v259
    %467 = vmatmul.mubr.f32.gmra.mrb[0].mxu0 %v258
    %v468 = vpop.f32.mrb[0].mxu0
    %v469 = vadd.f32 0.0, %v468
    %v470 = vpop.f32.mrb[0].mxu0
    %v471 = vadd.f32 0.0, %v470
    %472 = vmatprep.mubr.f32.mxu0 %v265
    %473 = vmatmul.mubr.f32.gmra.mrb[0].mxu0 %v264
    %v474 = vpop.f32.mrb[0].mxu0
    %v475 = vadd.f32 0.0, %v474
    %v476 = vpop.f32.mrb[0].mxu0
    %v477 = vadd.f32 0.0, %v476
    %478 = vmatprep.mubr.f32.mxu0 %v271
    %479 = vmatmul.mubr.f32.gmra.mrb[0].mxu0 %v270
    %v480 = vpop.f32.mrb[0].mxu0
    %v481 = vadd.f32 0.0, %v480
    %v482 = vpop.f32.mrb[0].mxu0
    %v483 = vadd.f32 0.0, %v482
    %484 = vmatprep.mubr.f32.mxu0 %v277
    %485 = vmatmul.mubr.f32.gmra.mrb[0].mxu0 %v276
    %v486 = vpop.f32.mrb[0].mxu0
    %v487 = vadd.f32 0.0, %v486
    %v488 = vpop.f32.mrb[0].mxu0
    %v489 = vadd.f32 0.0, %v488
    %490 = vmatprep.mubr.f32.mxu0 %v283
    %491 = vmatmul.mubr.f32.gmra.mrb[0].mxu0 %v282
    %v492 = vpop.f32.mrb[0].mxu0
    %v493 = vadd.f32 0.0, %v492
    %v494 = vpop.f32.mrb[0].mxu0
    %v495 = vadd.f32 0.0, %v494
    %496 = vmatprep.mubr.f32.mxu0 %v289
    %497 = vmatmul.mubr.f32.gmra.mrb[0].mxu0 %v288
    %v498 = vpop.f32.mrb[0].mxu0
    %v499 = vadd.f32 0.0, %v498
    %v500 = vpop.f32.mrb[0].mxu0
    %v501 = vadd.f32 0.0, %v500
    %502 = vmatprep.mubr.f32.mxu0 %v295
    %503 = vmatmul.mubr.f32.gmra.mrb[0].mxu0 %v294
    %v504 = vpop.f32.mrb[0].mxu0
    %v505 = vadd.f32 0.0, %v504
    %v506 = vpop.f32.mrb[0].mxu0
    %v507 = vadd.f32 0.0, %v506
    %508 = vmatprep.mubr.f32.mxu0 %v301
    %509 = vmatmul.mubr.f32.gmra.mrb[0].mxu0 %v300
    %v510 = vpop.f32.mrb[0].mxu0
    %v511 = vadd.f32 0.0, %v510
    %v512 = vpop.f32.mrb[0].mxu0
    %v513 = vadd.f32 0.0, %v512
    %514 = vmatprep.mubr.f32.mxu0 %v307
    %515 = vmatmul.mubr.f32.gmra.mrb[0].mxu0 %v306
    %v516 = vpop.f32.mrb[0].mxu0
    %v517 = vadd.f32 0.0, %v516
    %v518 = vpop.f32.mrb[0].mxu0
    %v519 = vadd.f32 0.0, %v518
    %520 = vmatprep.mubr.f32.mxu0 %v313
    %521 = vmatmul.mubr.f32.gmra.mrb[0].mxu0 %v312
    %v522 = vpop.f32.mrb[0].mxu0
    %v523 = vadd.f32 0.0, %v522
    %v524 = vpop.f32.mrb[0].mxu0
    %v525 = vadd.f32 0.0, %v524
    %526 = vmatprep.mubr.f32.mxu0 %v319
    %527 = vmatmul.mubr.f32.gmra.mrb[0].mxu0 %v318
    %v528 = vpop.f32.mrb[0].mxu0
    %v529 = vadd.f32 0.0, %v528
    %v530 = vpop.f32.mrb[0].mxu0
    %v531 = vadd.f32 0.0, %v530
    %532 = vmatprep.mubr.f32.mxu0 %v325
    %533 = vmatmul.mubr.f32.gmra.mrb[0].mxu0 %v324
    %v534 = vpop.f32.mrb[0].mxu0
    %v535 = vadd.f32 0.0, %v534
    %v536 = vpop.f32.mrb[0].mxu0
    %v537 = vadd.f32 0.0, %v536
    %538 = vmatprep.mubr.f32.mxu0 %v331
    %539 = vmatmul.mubr.f32.gmra.mrb[0].mxu0 %v330
    %v540 = vpop.f32.mrb[0].mxu0
    %v541 = vadd.f32 0.0, %v540
    %v542 = vpop.f32.mrb[0].mxu0
    %v543 = vadd.f32 0.0, %v542
    %544 = vmatprep.mubr.f32.mxu0 %v337
    %545 = vmatmul.mubr.f32.gmra.mrb[0].mxu0 %v336
    %v546 = vpop.f32.mrb[0].mxu0
    %v547 = vadd.f32 0.0, %v546
    %v548 = vpop.f32.mrb[0].mxu0
    %v549 = vadd.f32 0.0, %v548
    %550 = vmatprep.mubr.f32.mxu0 %v343
    %551 = vmatmul.mubr.f32.gmra.mrb[0].mxu0 %v342
    %v552 = vpop.f32.mrb[0].mxu0
    %v553 = vadd.f32 0.0, %v552
    %v554 = vpop.f32.mrb[0].mxu0
    %v555 = vadd.f32 0.0, %v554
    %556 = vmatprep.mubr.f32.mxu0 %v349
    %557 = vmatmul.mubr.f32.gmra.mrb[0].mxu0 %v348
    %v558 = vpop.f32.mrb[0].mxu0
    %v559 = vadd.f32 0.0, %v558
    %v560 = vpop.f32.mrb[0].mxu0
    %v561 = vadd.f32 0.0, %v560
    %562 = vdwg.mxu0
    %563 = vmatprep.subr.mxu0 %v83
    %564 = vmatpush1.msra.mxu0 %v82
    %565 = vmatprep.subr.mxu0 %v85
    %566 = vmatpush1.msra.mxu0 %v84
    %567 = vmatprep.subr.mxu0 %v87
    %568 = vmatpush1.msra.mxu0 %v86
    %569 = vmatprep.subr.mxu0 %v89
    %570 = vmatpush1.msra.mxu0 %v88
    %571 = vmatprep.subr.mxu0 %v91
    %572 = vmatpush1.msra.mxu0 %v90
    %573 = vmatprep.subr.mxu0 %v93
    %574 = vmatpush1.msra.mxu0 %v92
    %575 = vmatprep.subr.mxu0 %v95
    %576 = vmatpush1.msra.mxu0 %v94
    %577 = vmatprep.subr.mxu0 %v97
    %578 = vmatpush1.msra.mxu0 %v96
    %579 = vmatprep.subr.mxu0 %v99
    %580 = vmatpush1.msra.mxu0 %v98
    %581 = vmatprep.subr.mxu0 %v101
    %582 = vmatpush1.msra.mxu0 %v100
    %583 = vmatprep.subr.mxu0 %v103
    %584 = vmatpush1.msra.mxu0 %v102
    %585 = vmatprep.subr.mxu0 %v105
    %586 = vmatpush1.msra.mxu0 %v104
    %587 = vmatprep.subr.mxu0 %v107
    %588 = vmatpush1.msra.mxu0 %v106
    %589 = vmatprep.subr.mxu0 %v109
    %590 = vmatpush1.msra.mxu0 %v108
    %591 = vmatprep.subr.mxu0 %v111
    %592 = vmatpush1.msra.mxu0 %v110
    %593 = vmatprep.subr.mxu0 %v113
    %594 = vmatpush1.msra.mxu0 %v112
    %595 = vmatprep.subr.mxu0 %v115
    %596 = vmatpush1.msra.mxu0 %v114
    %597 = vmatprep.subr.mxu0 %v117
    %598 = vmatpush1.msra.mxu0 %v116
    %599 = vmatprep.subr.mxu0 %v119
    %600 = vmatpush1.msra.mxu0 %v118
    %601 = vmatprep.subr.mxu0 %v121
    %602 = vmatpush1.msra.mxu0 %v120
    %603 = vmatprep.subr.mxu0 %v123
    %604 = vmatpush1.msra.mxu0 %v122
    %605 = vmatprep.subr.mxu0 %v125
    %606 = vmatpush1.msra.mxu0 %v124
    %607 = vmatprep.subr.mxu0 %v127
    %608 = vmatpush1.msra.mxu0 %v126
    %609 = vmatprep.subr.mxu0 %v129
    %610 = vmatpush1.msra.mxu0 %v128
    %611 = vmatprep.subr.mxu0 %v131
    %612 = vmatpush1.msra.mxu0 %v130
    %613 = vmatprep.subr.mxu0 %v133
    %614 = vmatpush1.msra.mxu0 %v132
    %615 = vmatprep.subr.mxu0 %v135
    %616 = vmatpush1.msra.mxu0 %v134
    %617 = vmatprep.subr.mxu0 %v137
    %618 = vmatpush1.msra.mxu0 %v136
    %619 = vmatprep.subr.mxu0 %v139
    %620 = vmatpush1.msra.mxu0 %v138
    %621 = vmatprep.subr.mxu0 %v141
    %622 = vmatpush1.msra.mxu0 %v140
    %623 = vmatprep.subr.mxu0 %v143
    %624 = vmatpush1.msra.mxu0 %v142
    %625 = vmatprep.subr.mxu0 %v145
    %626 = vmatpush1.msra.mxu0 %v144
    %627 = vmatprep.mubr.f32.mxu0 %v213
    %628 = vmatmul.mubr.f32.gmra.mrb[0].mxu0 %v212
    %v629 = vpop.f32.mrb[0].mxu0
    %v630 = vadd.f32 %v421, %v629
    %v631 = vpop.f32.mrb[0].mxu0
    %v632 = vadd.f32 %v423, %v631
    %633 = vmatprep.mubr.f32.mxu0 %v219
    %634 = vmatmul.mubr.f32.gmra.mrb[0].mxu0 %v218
    %v635 = vpop.f32.mrb[0].mxu0
    %v636 = vadd.f32 %v427, %v635
    %v637 = vpop.f32.mrb[0].mxu0
    %v638 = vadd.f32 %v429, %v637
    %639 = vmatprep.mubr.f32.mxu0 %v225
    %640 = vmatmul.mubr.f32.gmra.mrb[0].mxu0 %v224
    %v641 = vpop.f32.mrb[0].mxu0
    %v642 = vadd.f32 %v433, %v641
    %v643 = vpop.f32.mrb[0].mxu0
    %v644 = vadd.f32 %v435, %v643
    %645 = vmatprep.mubr.f32.mxu0 %v231
    %646 = vmatmul.mubr.f32.gmra.mrb[0].mxu0 %v230
    %v647 = vpop.f32.mrb[0].mxu0
    %v648 = vadd.f32 %v439, %v647
    %v649 = vpop.f32.mrb[0].mxu0
    %v650 = vadd.f32 %v441, %v649
    %651 = vmatprep.mubr.f32.mxu0 %v237
    %652 = vmatmul.mubr.f32.gmra.mrb[0].mxu0 %v236
    %v653 = vpop.f32.mrb[0].mxu0
    %v654 = vadd.f32 %v445, %v653
    %v655 = vpop.f32.mrb[0].mxu0
    %v656 = vadd.f32 %v447, %v655
    %657 = vmatprep.mubr.f32.mxu0 %v243
    %658 = vmatmul.mubr.f32.gmra.mrb[0].mxu0 %v242
    %v659 = vpop.f32.mrb[0].mxu0
    %v660 = vadd.f32 %v451, %v659
    %v661 = vpop.f32.mrb[0].mxu0
    %v662 = vadd.f32 %v453, %v661
    %663 = vmatprep.mubr.f32.mxu0 %v249
    %664 = vmatmul.mubr.f32.gmra.mrb[0].mxu0 %v248
    %v665 = vpop.f32.mrb[0].mxu0
    %v666 = vadd.f32 %v457, %v665
    %v667 = vpop.f32.mrb[0].mxu0
    %v668 = vadd.f32 %v459, %v667
    %669 = vmatprep.mubr.f32.mxu0 %v255
    %670 = vmatmul.mubr.f32.gmra.mrb[0].mxu0 %v254
    %v671 = vpop.f32.mrb[0].mxu0
    %v672 = vadd.f32 %v463, %v671
    %v673 = vpop.f32.mrb[0].mxu0
    %v674 = vadd.f32 %v465, %v673
    %675 = vmatprep.mubr.f32.mxu0 %v261
    %676 = vmatmul.mubr.f32.gmra.mrb[0].mxu0 %v260
    %v677 = vpop.f32.mrb[0].mxu0
    %v678 = vadd.f32 %v469, %v677
    %v679 = vpop.f32.mrb[0].mxu0
    %v680 = vadd.f32 %v471, %v679
    %681 = vmatprep.mubr.f32.mxu0 %v267
    %682 = vmatmul.mubr.f32.gmra.mrb[0].mxu0 %v266
    %v683 = vpop.f32.mrb[0].mxu0
    %v684 = vadd.f32 %v475, %v683
    %v685 = vpop.f32.mrb[0].mxu0
    %v686 = vadd.f32 %v477, %v685
    %687 = vmatprep.mubr.f32.mxu0 %v273
    %688 = vmatmul.mubr.f32.gmra.mrb[0].mxu0 %v272
    %v689 = vpop.f32.mrb[0].mxu0
    %v690 = vadd.f32 %v481, %v689
    %v691 = vpop.f32.mrb[0].mxu0
    %v692 = vadd.f32 %v483, %v691
    %693 = vmatprep.mubr.f32.mxu0 %v279
    %694 = vmatmul.mubr.f32.gmra.mrb[0].mxu0 %v278
    %v695 = vpop.f32.mrb[0].mxu0
    %v696 = vadd.f32 %v487, %v695
    %v697 = vpop.f32.mrb[0].mxu0
    %v698 = vadd.f32 %v489, %v697
    %699 = vmatprep.mubr.f32.mxu0 %v285
    %700 = vmatmul.mubr.f32.gmra.mrb[0].mxu0 %v284
    %v701 = vpop.f32.mrb[0].mxu0
    %v702 = vadd.f32 %v493, %v701
    %v703 = vpop.f32.mrb[0].mxu0
    %v704 = vadd.f32 %v495, %v703
    %705 = vmatprep.mubr.f32.mxu0 %v291
    %706 = vmatmul.mubr.f32.gmra.mrb[0].mxu0 %v290
    %v707 = vpop.f32.mrb[0].mxu0
    %v708 = vadd.f32 %v499, %v707
    %v709 = vpop.f32.mrb[0].mxu0
    %v710 = vadd.f32 %v501, %v709
    %711 = vmatprep.mubr.f32.mxu0 %v297
    %712 = vmatmul.mubr.f32.gmra.mrb[0].mxu0 %v296
    %v713 = vpop.f32.mrb[0].mxu0
    %v714 = vadd.f32 %v505, %v713
    %v715 = vpop.f32.mrb[0].mxu0
    %v716 = vadd.f32 %v507, %v715
    %717 = vmatprep.mubr.f32.mxu0 %v303
    %718 = vmatmul.mubr.f32.gmra.mrb[0].mxu0 %v302
    %v719 = vpop.f32.mrb[0].mxu0
    %v720 = vadd.f32 %v511, %v719
    %v721 = vpop.f32.mrb[0].mxu0
    %v722 = vadd.f32 %v513, %v721
    %723 = vmatprep.mubr.f32.mxu0 %v309
    %724 = vmatmul.mubr.f32.gmra.mrb[0].mxu0 %v308
    %v725 = vpop.f32.mrb[0].mxu0
    %v726 = vadd.f32 %v517, %v725
    %v727 = vpop.f32.mrb[0].mxu0
    %v728 = vadd.f32 %v519, %v727
    %729 = vmatprep.mubr.f32.mxu0 %v315
    %730 = vmatmul.mubr.f32.gmra.mrb[0].mxu0 %v314
    %v731 = vpop.f32.mrb[0].mxu0
    %v732 = vadd.f32 %v523, %v731
    %v733 = vpop.f32.mrb[0].mxu0
    %v734 = vadd.f32 %v525, %v733
    %735 = vmatprep.mubr.f32.mxu0 %v321
    %736 = vmatmul.mubr.f32.gmra.mrb[0].mxu0 %v320
    %v737 = vpop.f32.mrb[0].mxu0
    %v738 = vadd.f32 %v529, %v737
    %v739 = vpop.f32.mrb[0].mxu0
    %v740 = vadd.f32 %v531, %v739
    %741 = vmatprep.mubr.f32.mxu0 %v327
    %742 = vmatmul.mubr.f32.gmra.mrb[0].mxu0 %v326
    %v743 = vpop.f32.mrb[0].mxu0
    %v744 = vadd.f32 %v535, %v743
    %v745 = vpop.f32.mrb[0].mxu0
    %v746 = vadd.f32 %v537, %v745
    %747 = vmatprep.mubr.f32.mxu0 %v333
    %748 = vmatmul.mubr.f32.gmra.mrb[0].mxu0 %v332
    %v749 = vpop.f32.mrb[0].mxu0
    %v750 = vadd.f32 %v541, %v749
    %v751 = vpop.f32.mrb[0].mxu0
    %v752 = vadd.f32 %v543, %v751
    %753 = vmatprep.mubr.f32.mxu0 %v339
    %754 = vmatmul.mubr.f32.gmra.mrb[0].mxu0 %v338
    %v755 = vpop.f32.mrb[0].mxu0
    %v756 = vadd.f32 %v547, %v755
    %v757 = vpop.f32.mrb[0].mxu0
    %v758 = vadd.f32 %v549, %v757
    %759 = vmatprep.mubr.f32.mxu0 %v345
    %760 = vmatmul.mubr.f32.gmra.mrb[0].mxu0 %v344
    %v761 = vpop.f32.mrb[0].mxu0
    %v762 = vadd.f32 %v553, %v761
    %v763 = vpop.f32.mrb[0].mxu0
    %v764 = vadd.f32 %v555, %v763
    %765 = vmatprep.mubr.f32.mxu0 %v351
    %766 = vmatmul.mubr.f32.gmra.mrb[0].mxu0 %v350
    %v767 = vpop.f32.mrb[0].mxu0
    %v768 = vadd.f32 %v559, %v767
    %v769 = vpop.f32.mrb[0].mxu0
    %v770 = vadd.f32 %v561, %v769
    %771 = vdwg.mxu0
    %772 = vmatprep.subr.mxu0 %v147
    %773 = vmatpush1.msra.mxu0 %v146
    %774 = vmatprep.subr.mxu0 %v149
    %775 = vmatpush1.msra.mxu0 %v148
    %776 = vmatprep.subr.mxu0 %v151
    %777 = vmatpush1.msra.mxu0 %v150
    %778 = vmatprep.subr.mxu0 %v153
    %779 = vmatpush1.msra.mxu0 %v152
    %780 = vmatprep.subr.mxu0 %v155
    %781 = vmatpush1.msra.mxu0 %v154
    %782 = vmatprep.subr.mxu0 %v157
    %783 = vmatpush1.msra.mxu0 %v156
    %784 = vmatprep.subr.mxu0 %v159
    %785 = vmatpush1.msra.mxu0 %v158
    %786 = vmatprep.subr.mxu0 %v161
    %787 = vmatpush1.msra.mxu0 %v160
    %788 = vmatprep.subr.mxu0 %v163
    %789 = vmatpush1.msra.mxu0 %v162
    %790 = vmatprep.subr.mxu0 %v165
    %791 = vmatpush1.msra.mxu0 %v164
    %792 = vmatprep.subr.mxu0 %v167
    %793 = vmatpush1.msra.mxu0 %v166
    %794 = vmatprep.subr.mxu0 %v169
    %795 = vmatpush1.msra.mxu0 %v168
    %796 = vmatprep.subr.mxu0 %v171
    %797 = vmatpush1.msra.mxu0 %v170
    %798 = vmatprep.subr.mxu0 %v173
    %799 = vmatpush1.msra.mxu0 %v172
    %800 = vmatprep.subr.mxu0 %v175
    %801 = vmatpush1.msra.mxu0 %v174
    %802 = vmatprep.subr.mxu0 %v177
    %803 = vmatpush1.msra.mxu0 %v176
    %804 = vmatprep.subr.mxu0 %v179
    %805 = vmatpush1.msra.mxu0 %v178
    %806 = vmatprep.subr.mxu0 %v181
    %807 = vmatpush1.msra.mxu0 %v180
    %808 = vmatprep.subr.mxu0 %v183
    %809 = vmatpush1.msra.mxu0 %v182
    %810 = vmatprep.subr.mxu0 %v185
    %811 = vmatpush1.msra.mxu0 %v184
    %812 = vmatprep.subr.mxu0 %v187
    %813 = vmatpush1.msra.mxu0 %v186
    %814 = vmatprep.subr.mxu0 %v189
    %815 = vmatpush1.msra.mxu0 %v188
    %816 = vmatprep.subr.mxu0 %v191
    %817 = vmatpush1.msra.mxu0 %v190
    %818 = vmatprep.subr.mxu0 %v193
    %819 = vmatpush1.msra.mxu0 %v192
    %820 = vmatprep.subr.mxu0 %v195
    %821 = vmatpush1.msra.mxu0 %v194
    %822 = vmatprep.subr.mxu0 %v197
    %823 = vmatpush1.msra.mxu0 %v196
    %824 = vmatprep.subr.mxu0 %v199
    %825 = vmatpush1.msra.mxu0 %v198
    %826 = vmatprep.subr.mxu0 %v201
    %827 = vmatpush1.msra.mxu0 %v200
    %828 = vmatprep.subr.mxu0 %v203
    %829 = vmatpush1.msra.mxu0 %v202
    %830 = vmatprep.subr.mxu0 %v205
    %831 = vmatpush1.msra.mxu0 %v204
    %832 = vmatprep.subr.mxu0 %v207
    %833 = vmatpush1.msra.mxu0 %v206
    %834 = vmatprep.subr.mxu0 %v209
    %835 = vmatpush1.msra.mxu0 %v208
    %836 = vmatprep.mubr.f32.mxu0 %v215
    %837 = vmatmul.mubr.f32.gmra.mrb[0].mxu0 %v214
    %v838 = vpop.f32.mrb[0].mxu0
    %v839 = vadd.f32 %v630, %v838
    %v840 = vpop.f32.mrb[0].mxu0
    %v841 = vadd.f32 %v632, %v840
    %842 = vmatprep.mubr.f32.mxu0 %v221
    %843 = vmatmul.mubr.f32.gmra.mrb[0].mxu0 %v220
    %v844 = vpop.f32.mrb[0].mxu0
    %v845 = vadd.f32 %v636, %v844
    %v846 = vpop.f32.mrb[0].mxu0
    %v847 = vadd.f32 %v638, %v846
    %848 = vmatprep.mubr.f32.mxu0 %v227
    %849 = vmatmul.mubr.f32.gmra.mrb[0].mxu0 %v226
    %v850 = vpop.f32.mrb[0].mxu0
    %v851 = vadd.f32 %v642, %v850
    %v852 = vpop.f32.mrb[0].mxu0
    %v853 = vadd.f32 %v644, %v852
    %854 = vmatprep.mubr.f32.mxu0 %v233
    %855 = vmatmul.mubr.f32.gmra.mrb[0].mxu0 %v232
    %v856 = vpop.f32.mrb[0].mxu0
    %v857 = vadd.f32 %v648, %v856
    %v858 = vpop.f32.mrb[0].mxu0
    %v859 = vadd.f32 %v650, %v858
    %860 = vmatprep.mubr.f32.mxu0 %v239
    %861 = vmatmul.mubr.f32.gmra.mrb[0].mxu0 %v238
    %v862 = vpop.f32.mrb[0].mxu0
    %v863 = vadd.f32 %v654, %v862
    %v864 = vpop.f32.mrb[0].mxu0
    %v865 = vadd.f32 %v656, %v864
    %866 = vmatprep.mubr.f32.mxu0 %v245
    %867 = vmatmul.mubr.f32.gmra.mrb[0].mxu0 %v244
    %v868 = vpop.f32.mrb[0].mxu0
    %v869 = vadd.f32 %v660, %v868
    %v870 = vpop.f32.mrb[0].mxu0
    %v871 = vadd.f32 %v662, %v870
    %872 = vmatprep.mubr.f32.mxu0 %v251
    %873 = vmatmul.mubr.f32.gmra.mrb[0].mxu0 %v250
    %v874 = vpop.f32.mrb[0].mxu0
    %v875 = vadd.f32 %v666, %v874
    %v876 = vpop.f32.mrb[0].mxu0
    %v877 = vadd.f32 %v668, %v876
    %878 = vmatprep.mubr.f32.mxu0 %v257
    %879 = vmatmul.mubr.f32.gmra.mrb[0].mxu0 %v256
    %v880 = vpop.f32.mrb[0].mxu0
    %v881 = vadd.f32 %v672, %v880
    %v882 = vpop.f32.mrb[0].mxu0
    %v883 = vadd.f32 %v674, %v882
    %884 = vmatprep.mubr.f32.mxu0 %v263
    %885 = vmatmul.mubr.f32.gmra.mrb[0].mxu0 %v262
    %v886 = vpop.f32.mrb[0].mxu0
    %v887 = vadd.f32 %v678, %v886
    %v888 = vpop.f32.mrb[0].mxu0
    %v889 = vadd.f32 %v680, %v888
    %890 = vmatprep.mubr.f32.mxu0 %v269
    %891 = vmatmul.mubr.f32.gmra.mrb[0].mxu0 %v268
    %v892 = vpop.f32.mrb[0].mxu0
    %v893 = vadd.f32 %v684, %v892
    %v894 = vpop.f32.mrb[0].mxu0
    %v895 = vadd.f32 %v686, %v894
    %896 = vmatprep.mubr.f32.mxu0 %v275
    %897 = vmatmul.mubr.f32.gmra.mrb[0].mxu0 %v274
    %v898 = vpop.f32.mrb[0].mxu0
    %v899 = vadd.f32 %v690, %v898
    %v900 = vpop.f32.mrb[0].mxu0
    %v901 = vadd.f32 %v692, %v900
    %902 = vmatprep.mubr.f32.mxu0 %v281
    %903 = vmatmul.mubr.f32.gmra.mrb[0].mxu0 %v280
    %v904 = vpop.f32.mrb[0].mxu0
    %v905 = vadd.f32 %v696, %v904
    %v906 = vpop.f32.mrb[0].mxu0
    %v907 = vadd.f32 %v698, %v906
    %908 = vmatprep.mubr.f32.mxu0 %v287
    %909 = vmatmul.mubr.f32.gmra.mrb[0].mxu0 %v286
    %v910 = vpop.f32.mrb[0].mxu0
    %v911 = vadd.f32 %v702, %v910
    %v912 = vpop.f32.mrb[0].mxu0
    %v913 = vadd.f32 %v704, %v912
    %914 = vmatprep.mubr.f32.mxu0 %v293
    %915 = vmatmul.mubr.f32.gmra.mrb[0].mxu0 %v292
    %v916 = vpop.f32.mrb[0].mxu0
    %v917 = vadd.f32 %v708, %v916
    %v918 = vpop.f32.mrb[0].mxu0
    %v919 = vadd.f32 %v710, %v918
    %920 = vmatprep.mubr.f32.mxu0 %v299
    %921 = vmatmul.mubr.f32.gmra.mrb[0].mxu0 %v298
    %v922 = vpop.f32.mrb[0].mxu0
    %v923 = vadd.f32 %v714, %v922
    %v924 = vpop.f32.mrb[0].mxu0
    %v925 = vadd.f32 %v716, %v924
    %926 = vmatprep.mubr.f32.mxu0 %v305
    %927 = vmatmul.mubr.f32.gmra.mrb[0].mxu0 %v304
    %v928 = vpop.f32.mrb[0].mxu0
    %v929 = vadd.f32 %v720, %v928
    %v930 = vpop.f32.mrb[0].mxu0
    %v931 = vadd.f32 %v722, %v930
    %932 = vmatprep.mubr.f32.mxu0 %v311
    %933 = vmatmul.mubr.f32.gmra.mrb[0].mxu0 %v310
    %v934 = vpop.f32.mrb[0].mxu0
    %v935 = vadd.f32 %v726, %v934
    %v936 = vpop.f32.mrb[0].mxu0
    %v937 = vadd.f32 %v728, %v936
    %938 = vmatprep.mubr.f32.mxu0 %v317
    %939 = vmatmul.mubr.f32.gmra.mrb[0].mxu0 %v316
    %v940 = vpop.f32.mrb[0].mxu0
    %v941 = vadd.f32 %v732, %v940
    %v942 = vpop.f32.mrb[0].mxu0
    %v943 = vadd.f32 %v734, %v942
    %944 = vmatprep.mubr.f32.mxu0 %v323
    %945 = vmatmul.mubr.f32.gmra.mrb[0].mxu0 %v322
    %v946 = vpop.f32.mrb[0].mxu0
    %v947 = vadd.f32 %v738, %v946
    %v948 = vpop.f32.mrb[0].mxu0
    %v949 = vadd.f32 %v740, %v948
    %950 = vmatprep.mubr.f32.mxu0 %v329
    %951 = vmatmul.mubr.f32.gmra.mrb[0].mxu0 %v328
    %v952 = vpop.f32.mrb[0].mxu0
    %v953 = vadd.f32 %v744, %v952
    %v954 = vpop.f32.mrb[0].mxu0
    %v955 = vadd.f32 %v746, %v954
    %956 = vmatprep.mubr.f32.mxu0 %v335
    %957 = vmatmul.mubr.f32.gmra.mrb[0].mxu0 %v334
    %v958 = vpop.f32.mrb[0].mxu0
    %v959 = vadd.f32 %v750, %v958
    %v960 = vpop.f32.mrb[0].mxu0
    %v961 = vadd.f32 %v752, %v960
    %962 = vmatprep.mubr.f32.mxu0 %v341
    %963 = vmatmul.mubr.f32.gmra.mrb[0].mxu0 %v340
    %v964 = vpop.f32.mrb[0].mxu0
    %v965 = vadd.f32 %v756, %v964
    %v966 = vpop.f32.mrb[0].mxu0
    %v967 = vadd.f32 %v758, %v966
    %968 = vmatprep.mubr.f32.mxu0 %v347
    %969 = vmatmul.mubr.f32.gmra.mrb[0].mxu0 %v346
    %v970 = vpop.f32.mrb[0].mxu0
    %v971 = vadd.f32 %v762, %v970
    %v972 = vpop.f32.mrb[0].mxu0
    %v973 = vadd.f32 %v764, %v972
    %974 = vmatprep.mubr.f32.mxu0 %v353
    %975 = vmatmul.mubr.f32.gmra.mrb[0].mxu0 %v352
    %v976 = vpop.f32.mrb[0].mxu0
    %v977 = vadd.f32 %v768, %v976
    %v978 = vpop.f32.mrb[0].mxu0
    %v979 = vadd.f32 %v770, %v978
    %980 = vdwg.mxu0
    %vm981 = vcmask 556032
    %v982 = vsel %vm981, %v841, 0.0
    %v983 = vadd.f32 %v839, %v982
    %984 = vadd.xlane.f32.xlu0 %v983
    %v985 = vpop.xlane.xlu0 %984
    %v986 = vsel %vm981, %v847, 0.0
    %v987 = vadd.f32 %v845, %v986
    %988 = vadd.xlane.f32.xlu0 %v987
    %v989 = vpop.xlane.xlu0 %988
    %v990 = vsel %vm981, %v853, 0.0
    %v991 = vadd.f32 %v851, %v990
    %992 = vadd.xlane.f32.xlu0 %v991
    %v993 = vpop.xlane.xlu0 %992
    %v994 = vsel %vm981, %v859, 0.0
    %v995 = vadd.f32 %v857, %v994
    %996 = vadd.xlane.f32.xlu0 %v995
    %v997 = vpop.xlane.xlu0 %996
    %v998 = vsel %vm981, %v865, 0.0
    %v999 = vadd.f32 %v863, %v998
    %1000 = vadd.xlane.f32.xlu0 %v999
    %v1001 = vpop.xlane.xlu0 %1000
    %v1002 = vsel %vm981, %v871, 0.0
    %v1003 = vadd.f32 %v869, %v1002
    %1004 = vadd.xlane.f32.xlu0 %v1003
    %v1005 = vpop.xlane.xlu0 %1004
    %v1006 = vsel %vm981, %v877, 0.0
    %v1007 = vadd.f32 %v875, %v1006
    %1008 = vadd.xlane.f32.xlu0 %v1007
    %v1009 = vpop.xlane.xlu0 %1008
    %v1010 = vsel %vm981, %v883, 0.0
    %v1011 = vadd.f32 %v881, %v1010
    %1012 = vadd.xlane.f32.xlu0 %v1011
    %v1013 = vpop.xlane.xlu0 %1012
    %v1014 = vsel %vm981, %v889, 0.0
    %v1015 = vadd.f32 %v887, %v1014
    %1016 = vadd.xlane.f32.xlu0 %v1015
    %v1017 = vpop.xlane.xlu0 %1016
    %v1018 = vsel %vm981, %v895, 0.0
    %v1019 = vadd.f32 %v893, %v1018
    %1020 = vadd.xlane.f32.xlu0 %v1019
    %v1021 = vpop.xlane.xlu0 %1020
    %v1022 = vsel %vm981, %v901, 0.0
    %v1023 = vadd.f32 %v899, %v1022
    %1024 = vadd.xlane.f32.xlu0 %v1023
    %v1025 = vpop.xlane.xlu0 %1024
    %v1026 = vsel %vm981, %v907, 0.0
    %v1027 = vadd.f32 %v905, %v1026
    %1028 = vadd.xlane.f32.xlu0 %v1027
    %v1029 = vpop.xlane.xlu0 %1028
    %v1030 = vsel %vm981, %v913, 0.0
    %v1031 = vadd.f32 %v911, %v1030
    %1032 = vadd.xlane.f32.xlu0 %v1031
    %v1033 = vpop.xlane.xlu0 %1032
    %v1034 = vsel %vm981, %v919, 0.0
    %v1035 = vadd.f32 %v917, %v1034
    %1036 = vadd.xlane.f32.xlu0 %v1035
    %v1037 = vpop.xlane.xlu0 %1036
    %v1038 = vsel %vm981, %v925, 0.0
    %v1039 = vadd.f32 %v923, %v1038
    %1040 = vadd.xlane.f32.xlu0 %v1039
    %v1041 = vpop.xlane.xlu0 %1040
    %v1042 = vsel %vm981, %v931, 0.0
    %v1043 = vadd.f32 %v929, %v1042
    %1044 = vadd.xlane.f32.xlu0 %v1043
    %v1045 = vpop.xlane.xlu0 %1044
    %v1046 = vsel %vm981, %v937, 0.0
    %v1047 = vadd.f32 %v935, %v1046
    %1048 = vadd.xlane.f32.xlu0 %v1047
    %v1049 = vpop.xlane.xlu0 %1048
    %v1050 = vsel %vm981, %v943, 0.0
    %v1051 = vadd.f32 %v941, %v1050
    %1052 = vadd.xlane.f32.xlu0 %v1051
    %v1053 = vpop.xlane.xlu0 %1052
    %v1054 = vsel %vm981, %v949, 0.0
    %v1055 = vadd.f32 %v947, %v1054
    %1056 = vadd.xlane.f32.xlu0 %v1055
    %v1057 = vpop.xlane.xlu0 %1056
    %v1058 = vsel %vm981, %v955, 0.0
    %v1059 = vadd.f32 %v953, %v1058
    %1060 = vadd.xlane.f32.xlu0 %v1059
    %v1061 = vpop.xlane.xlu0 %1060
    %v1062 = vsel %vm981, %v961, 0.0
    %v1063 = vadd.f32 %v959, %v1062
    %1064 = vadd.xlane.f32.xlu0 %v1063
    %v1065 = vpop.xlane.xlu0 %1064
    %v1066 = vsel %vm981, %v967, 0.0
    %v1067 = vadd.f32 %v965, %v1066
    %1068 = vadd.xlane.f32.xlu0 %v1067
    %v1069 = vpop.xlane.xlu0 %1068
    %v1070 = vsel %vm981, %v973, 0.0
    %v1071 = vadd.f32 %v971, %v1070
    %1072 = vadd.xlane.f32.xlu0 %v1071
    %v1073 = vpop.xlane.xlu0 %1072
    %v1074 = vsel %vm981, %v979, 0.0
    %v1075 = vadd.f32 %v977, %v1074
    %1076 = vadd.xlane.f32.xlu0 %v1075
    %v1077 = vpop.xlane.xlu0 %1076
    %v1078 = vmul.f32 %v839, %v839
    %v1079 = vmul.f32 %v841, %v841
    %v1080 = vmul.f32 %v845, %v845
    %v1081 = vmul.f32 %v847, %v847
    %v1082 = vmul.f32 %v851, %v851
    %v1083 = vmul.f32 %v853, %v853
    %v1084 = vmul.f32 %v857, %v857
    %v1085 = vmul.f32 %v859, %v859
    %v1086 = vmul.f32 %v863, %v863
    %v1087 = vmul.f32 %v865, %v865
    %v1088 = vmul.f32 %v869, %v869
    %v1089 = vmul.f32 %v871, %v871
    %v1090 = vmul.f32 %v875, %v875
    %v1091 = vmul.f32 %v877, %v877
    %v1092 = vmul.f32 %v881, %v881
    %v1093 = vmul.f32 %v883, %v883
    %v1094 = vmul.f32 %v887, %v887
    %v1095 = vmul.f32 %v889, %v889
    %v1096 = vmul.f32 %v893, %v893
    %v1097 = vmul.f32 %v895, %v895
    %v1098 = vmul.f32 %v899, %v899
    %v1099 = vmul.f32 %v901, %v901
    %v1100 = vmul.f32 %v905, %v905
    %v1101 = vmul.f32 %v907, %v907
    %v1102 = vmul.f32 %v911, %v911
    %v1103 = vmul.f32 %v913, %v913
    %v1104 = vmul.f32 %v917, %v917
    %v1105 = vmul.f32 %v919, %v919
    %v1106 = vmul.f32 %v923, %v923
    %v1107 = vmul.f32 %v925, %v925
    %v1108 = vmul.f32 %v929, %v929
    %v1109 = vmul.f32 %v931, %v931
    %v1110 = vmul.f32 %v935, %v935
    %v1111 = vmul.f32 %v937, %v937
    %v1112 = vmul.f32 %v941, %v941
    %v1113 = vmul.f32 %v943, %v943
    %v1114 = vmul.f32 %v947, %v947
    %v1115 = vmul.f32 %v949, %v949
    %v1116 = vmul.f32 %v953, %v953
    %v1117 = vmul.f32 %v955, %v955
    %v1118 = vmul.f32 %v959, %v959
    %v1119 = vmul.f32 %v961, %v961
    %v1120 = vmul.f32 %v965, %v965
    %v1121 = vmul.f32 %v967, %v967
    %v1122 = vmul.f32 %v971, %v971
    %v1123 = vmul.f32 %v973, %v973
    %v1124 = vmul.f32 %v977, %v977
    %v1125 = vmul.f32 %v979, %v979
    %v1126 = vsel %vm981, %v1079, 0.0
    %v1127 = vadd.f32 %v1078, %v1126
    %1128 = vadd.xlane.f32.xlu0 %v1127
    %v1129 = vpop.xlane.xlu0 %1128
    %v1130 = vsel %vm981, %v1081, 0.0
    %v1131 = vadd.f32 %v1080, %v1130
    %1132 = vadd.xlane.f32.xlu0 %v1131
    %v1133 = vpop.xlane.xlu0 %1132
    %v1134 = vsel %vm981, %v1083, 0.0
    %v1135 = vadd.f32 %v1082, %v1134
    %1136 = vadd.xlane.f32.xlu0 %v1135
    %v1137 = vpop.xlane.xlu0 %1136
    %v1138 = vsel %vm981, %v1085, 0.0
    %v1139 = vadd.f32 %v1084, %v1138
    %1140 = vadd.xlane.f32.xlu0 %v1139
    %v1141 = vpop.xlane.xlu0 %1140
    %v1142 = vsel %vm981, %v1087, 0.0
    %v1143 = vadd.f32 %v1086, %v1142
    %1144 = vadd.xlane.f32.xlu0 %v1143
    %v1145 = vpop.xlane.xlu0 %1144
    %v1146 = vsel %vm981, %v1089, 0.0
    %v1147 = vadd.f32 %v1088, %v1146
    %1148 = vadd.xlane.f32.xlu0 %v1147
    %v1149 = vpop.xlane.xlu0 %1148
    %v1150 = vsel %vm981, %v1091, 0.0
    %v1151 = vadd.f32 %v1090, %v1150
    %1152 = vadd.xlane.f32.xlu0 %v1151
    %v1153 = vpop.xlane.xlu0 %1152
    %v1154 = vsel %vm981, %v1093, 0.0
    %v1155 = vadd.f32 %v1092, %v1154
    %1156 = vadd.xlane.f32.xlu0 %v1155
    %v1157 = vpop.xlane.xlu0 %1156
    %v1158 = vsel %vm981, %v1095, 0.0
    %v1159 = vadd.f32 %v1094, %v1158
    %1160 = vadd.xlane.f32.xlu0 %v1159
    %v1161 = vpop.xlane.xlu0 %1160
    %v1162 = vsel %vm981, %v1097, 0.0
    %v1163 = vadd.f32 %v1096, %v1162
    %1164 = vadd.xlane.f32.xlu0 %v1163
    %v1165 = vpop.xlane.xlu0 %1164
    %v1166 = vsel %vm981, %v1099, 0.0
    %v1167 = vadd.f32 %v1098, %v1166
    %1168 = vadd.xlane.f32.xlu0 %v1167
    %v1169 = vpop.xlane.xlu0 %1168
    %v1170 = vsel %vm981, %v1101, 0.0
    %v1171 = vadd.f32 %v1100, %v1170
    %1172 = vadd.xlane.f32.xlu0 %v1171
    %v1173 = vpop.xlane.xlu0 %1172
    %v1174 = vsel %vm981, %v1103, 0.0
    %v1175 = vadd.f32 %v1102, %v1174
    %1176 = vadd.xlane.f32.xlu0 %v1175
    %v1177 = vpop.xlane.xlu0 %1176
    %v1178 = vsel %vm981, %v1105, 0.0
    %v1179 = vadd.f32 %v1104, %v1178
    %1180 = vadd.xlane.f32.xlu0 %v1179
    %v1181 = vpop.xlane.xlu0 %1180
    %v1182 = vsel %vm981, %v1107, 0.0
    %v1183 = vadd.f32 %v1106, %v1182
    %1184 = vadd.xlane.f32.xlu0 %v1183
    %v1185 = vpop.xlane.xlu0 %1184
    %v1186 = vsel %vm981, %v1109, 0.0
    %v1187 = vadd.f32 %v1108, %v1186
    %1188 = vadd.xlane.f32.xlu0 %v1187
    %v1189 = vpop.xlane.xlu0 %1188
    %v1190 = vsel %vm981, %v1111, 0.0
    %v1191 = vadd.f32 %v1110, %v1190
    %1192 = vadd.xlane.f32.xlu0 %v1191
    %v1193 = vpop.xlane.xlu0 %1192
    %v1194 = vsel %vm981, %v1113, 0.0
    %v1195 = vadd.f32 %v1112, %v1194
    %1196 = vadd.xlane.f32.xlu0 %v1195
    %v1197 = vpop.xlane.xlu0 %1196
    %v1198 = vsel %vm981, %v1115, 0.0
    %v1199 = vadd.f32 %v1114, %v1198
    %1200 = vadd.xlane.f32.xlu0 %v1199
    %v1201 = vpop.xlane.xlu0 %1200
    %v1202 = vsel %vm981, %v1117, 0.0
    %v1203 = vadd.f32 %v1116, %v1202
    %1204 = vadd.xlane.f32.xlu0 %v1203
    %v1205 = vpop.xlane.xlu0 %1204
    %v1206 = vsel %vm981, %v1119, 0.0
    %v1207 = vadd.f32 %v1118, %v1206
    %1208 = vadd.xlane.f32.xlu0 %v1207
    %v1209 = vpop.xlane.xlu0 %1208
    %v1210 = vsel %vm981, %v1121, 0.0
    %v1211 = vadd.f32 %v1120, %v1210
    %1212 = vadd.xlane.f32.xlu0 %v1211
    %v1213 = vpop.xlane.xlu0 %1212
    %v1214 = vsel %vm981, %v1123, 0.0
    %v1215 = vadd.f32 %v1122, %v1214
    %1216 = vadd.xlane.f32.xlu0 %v1215
    %v1217 = vpop.xlane.xlu0 %1216
    %v1218 = vsel %vm981, %v1125, 0.0
    %v1219 = vadd.f32 %v1124, %v1218
    %1220 = vadd.xlane.f32.xlu0 %v1219
    %v1221 = vpop.xlane.xlu0 %1220
    %v1222 = vmul.f32 %v985, 0.0051020407
    %v1223 = vmul.f32 %v989, 0.0051020407
    %v1224 = vmul.f32 %v993, 0.0051020407
    %v1225 = vmul.f32 %v997, 0.0051020407
    %v1226 = vmul.f32 %v1001, 0.0051020407
    %v1227 = vmul.f32 %v1005, 0.0051020407
    %v1228 = vmul.f32 %v1009, 0.0051020407
    %v1229 = vmul.f32 %v1013, 0.0051020407
    %v1230 = vmul.f32 %v1017, 0.0051020407
    %v1231 = vmul.f32 %v1021, 0.0051020407
    %v1232 = vmul.f32 %v1025, 0.0051020407
    %v1233 = vmul.f32 %v1029, 0.0051020407
    %v1234 = vmul.f32 %v1033, 0.0051020407
    %v1235 = vmul.f32 %v1037, 0.0051020407
    %v1236 = vmul.f32 %v1041, 0.0051020407
    %v1237 = vmul.f32 %v1045, 0.0051020407
    %v1238 = vmul.f32 %v1049, 0.0051020407
    %v1239 = vmul.f32 %v1053, 0.0051020407
    %v1240 = vmul.f32 %v1057, 0.0051020407
    %v1241 = vmul.f32 %v1061, 0.0051020407
    %v1242 = vmul.f32 %v1065, 0.0051020407
    %v1243 = vmul.f32 %v1069, 0.0051020407
    %v1244 = vmul.f32 %v1073, 0.0051020407
    %v1245 = vmul.f32 %v1077, 0.0051020407
    %v1246 = vmul.f32 %v1129, 0.0051020407
    %v1247 = vmul.f32 %v1133, 0.0051020407
    %v1248 = vmul.f32 %v1137, 0.0051020407
    %v1249 = vmul.f32 %v1141, 0.0051020407
    %v1250 = vmul.f32 %v1145, 0.0051020407
    %v1251 = vmul.f32 %v1149, 0.0051020407
    %v1252 = vmul.f32 %v1153, 0.0051020407
    %v1253 = vmul.f32 %v1157, 0.0051020407
    %v1254 = vmul.f32 %v1161, 0.0051020407
    %v1255 = vmul.f32 %v1165, 0.0051020407
    %v1256 = vmul.f32 %v1169, 0.0051020407
    %v1257 = vmul.f32 %v1173, 0.0051020407
    %v1258 = vmul.f32 %v1177, 0.0051020407
    %v1259 = vmul.f32 %v1181, 0.0051020407
    %v1260 = vmul.f32 %v1185, 0.0051020407
    %v1261 = vmul.f32 %v1189, 0.0051020407
    %v1262 = vmul.f32 %v1193, 0.0051020407
    %v1263 = vmul.f32 %v1197, 0.0051020407
    %v1264 = vmul.f32 %v1201, 0.0051020407
    %v1265 = vmul.f32 %v1205, 0.0051020407
    %v1266 = vmul.f32 %v1209, 0.0051020407
    %v1267 = vmul.f32 %v1213, 0.0051020407
    %v1268 = vmul.f32 %v1217, 0.0051020407
    %v1269 = vmul.f32 %v1221, 0.0051020407
    %v1270 = vmul.f32 %v1222, %v1222
    %v1271 = vmul.f32 %v1223, %v1223
    %v1272 = vmul.f32 %v1224, %v1224
    %v1273 = vmul.f32 %v1225, %v1225
    %v1274 = vmul.f32 %v1226, %v1226
    %v1275 = vmul.f32 %v1227, %v1227
    %v1276 = vmul.f32 %v1228, %v1228
    %v1277 = vmul.f32 %v1229, %v1229
    %v1278 = vmul.f32 %v1230, %v1230
    %v1279 = vmul.f32 %v1231, %v1231
    %v1280 = vmul.f32 %v1232, %v1232
    %v1281 = vmul.f32 %v1233, %v1233
    %v1282 = vmul.f32 %v1234, %v1234
    %v1283 = vmul.f32 %v1235, %v1235
    %v1284 = vmul.f32 %v1236, %v1236
    %v1285 = vmul.f32 %v1237, %v1237
    %v1286 = vmul.f32 %v1238, %v1238
    %v1287 = vmul.f32 %v1239, %v1239
    %v1288 = vmul.f32 %v1240, %v1240
    %v1289 = vmul.f32 %v1241, %v1241
    %v1290 = vmul.f32 %v1242, %v1242
    %v1291 = vmul.f32 %v1243, %v1243
    %v1292 = vmul.f32 %v1244, %v1244
    %v1293 = vmul.f32 %v1245, %v1245
    %v1294 = vsub.f32 %v1246, %v1270
    %v1295 = vsub.f32 %v1247, %v1271
    %v1296 = vsub.f32 %v1248, %v1272
    %v1297 = vsub.f32 %v1249, %v1273
    %v1298 = vsub.f32 %v1250, %v1274
    %v1299 = vsub.f32 %v1251, %v1275
    %v1300 = vsub.f32 %v1252, %v1276
    %v1301 = vsub.f32 %v1253, %v1277
    %v1302 = vsub.f32 %v1254, %v1278
    %v1303 = vsub.f32 %v1255, %v1279
    %v1304 = vsub.f32 %v1256, %v1280
    %v1305 = vsub.f32 %v1257, %v1281
    %v1306 = vsub.f32 %v1258, %v1282
    %v1307 = vsub.f32 %v1259, %v1283
    %v1308 = vsub.f32 %v1260, %v1284
    %v1309 = vsub.f32 %v1261, %v1285
    %v1310 = vsub.f32 %v1262, %v1286
    %v1311 = vsub.f32 %v1263, %v1287
    %v1312 = vsub.f32 %v1264, %v1288
    %v1313 = vsub.f32 %v1265, %v1289
    %v1314 = vsub.f32 %v1266, %v1290
    %v1315 = vsub.f32 %v1267, %v1291
    %v1316 = vsub.f32 %v1268, %v1292
    %v1317 = vsub.f32 %v1269, %v1293
    %v1318 = vld [vmem:[%s2] sm:$0xff]
    %v1319 = vld [vmem:[%s2 + $0x8] sm:$0xff]
    %v1320 = vld [vmem:[%s2 + $0x10] sm:$0xff]
    %v1321 = vld [vmem:[%s2 + $0x18] sm:$0xff]
    %v1322 = vld [vmem:[%s2 + $0x20] sm:$0xff]
    %v1323 = vld [vmem:[%s2 + $0x28] sm:$0xff]
    %v1324 = vld [vmem:[%s2 + $0x30] sm:$0xff]
    %v1325 = vld [vmem:[%s2 + $0x38] sm:$0xff]
    %v1326 = vld [vmem:[%s2 + $0x40] sm:$0xff]
    %v1327 = vld [vmem:[%s2 + $0x48] sm:$0xff]
    %v1328 = vld [vmem:[%s2 + $0x50] sm:$0xff]
    %v1329 = vld [vmem:[%s2 + $0x58] sm:$0xff]
    %v1330 = vld [vmem:[%s2 + $0x60] sm:$0xff]
    %v1331 = vld [vmem:[%s2 + $0x68] sm:$0xff]
    %v1332 = vld [vmem:[%s2 + $0x70] sm:$0xff]
    %v1333 = vld [vmem:[%s2 + $0x78] sm:$0xff]
    %v1334 = vld [vmem:[%s2 + $0x80] sm:$0xff]
    %v1335 = vld [vmem:[%s2 + $0x88] sm:$0xff]
    %v1336 = vld [vmem:[%s2 + $0x90] sm:$0xff]
    %v1337 = vld [vmem:[%s2 + $0x98] sm:$0xff]
    %v1338 = vld [vmem:[%s2 + $0xa0] sm:$0xff]
    %v1339 = vld [vmem:[%s2 + $0xa8] sm:$0xff]
    %v1340 = vld [vmem:[%s2 + $0xb0] sm:$0xff]
    %v1341 = vld [vmem:[%s2 + $0xb8] sm:$0xff]
    %v1342 = vadd.f32 %v1294, 0.001
    %v1343 = vadd.f32 %v1295, 0.001
    %v1344 = vadd.f32 %v1296, 0.001
    %v1345 = vadd.f32 %v1297, 0.001
    %v1346 = vadd.f32 %v1298, 0.001
    %v1347 = vadd.f32 %v1299, 0.001
    %v1348 = vadd.f32 %v1300, 0.001
    %v1349 = vadd.f32 %v1301, 0.001
    %v1350 = vadd.f32 %v1302, 0.001
    %v1351 = vadd.f32 %v1303, 0.001
    %v1352 = vadd.f32 %v1304, 0.001
    %v1353 = vadd.f32 %v1305, 0.001
    %v1354 = vadd.f32 %v1306, 0.001
    %v1355 = vadd.f32 %v1307, 0.001
    %v1356 = vadd.f32 %v1308, 0.001
    %v1357 = vadd.f32 %v1309, 0.001
    %v1358 = vadd.f32 %v1310, 0.001
    %v1359 = vadd.f32 %v1311, 0.001
    %v1360 = vadd.f32 %v1312, 0.001
    %v1361 = vadd.f32 %v1313, 0.001
    %v1362 = vadd.f32 %v1314, 0.001
    %v1363 = vadd.f32 %v1315, 0.001
    %v1364 = vadd.f32 %v1316, 0.001
    %v1365 = vadd.f32 %v1317, 0.001
    %v1366 = vrsqrt.pop %v1342
    %v1367 = vrsqrt.pop %v1343
    %v1368 = vrsqrt.pop %v1344
    %v1369 = vrsqrt.pop %v1345
    %v1370 = vrsqrt.pop %v1346
    %v1371 = vrsqrt.pop %v1347
    %v1372 = vrsqrt.pop %v1348
    %v1373 = vrsqrt.pop %v1349
    %v1374 = vrsqrt.pop %v1350
    %v1375 = vrsqrt.pop %v1351
    %v1376 = vrsqrt.pop %v1352
    %v1377 = vrsqrt.pop %v1353
    %v1378 = vrsqrt.pop %v1354
    %v1379 = vrsqrt.pop %v1355
    %v1380 = vrsqrt.pop %v1356
    %v1381 = vrsqrt.pop %v1357
    %v1382 = vrsqrt.pop %v1358
    %v1383 = vrsqrt.pop %v1359
    %v1384 = vrsqrt.pop %v1360
    %v1385 = vrsqrt.pop %v1361
    %v1386 = vrsqrt.pop %v1362
    %v1387 = vrsqrt.pop %v1363
    %v1388 = vrsqrt.pop %v1364
    %v1389 = vrsqrt.pop %v1365
    %v1390 = vmul.f32 %v1318, %v1366
    %v1391 = vmul.f32 %v1319, %v1367
    %v1392 = vmul.f32 %v1320, %v1368
    %v1393 = vmul.f32 %v1321, %v1369
    %v1394 = vmul.f32 %v1322, %v1370
    %v1395 = vmul.f32 %v1323, %v1371
    %v1396 = vmul.f32 %v1324, %v1372
    %v1397 = vmul.f32 %v1325, %v1373
    %v1398 = vmul.f32 %v1326, %v1374
    %v1399 = vmul.f32 %v1327, %v1375
    %v1400 = vmul.f32 %v1328, %v1376
    %v1401 = vmul.f32 %v1329, %v1377
    %v1402 = vmul.f32 %v1330, %v1378
    %v1403 = vmul.f32 %v1331, %v1379
    %v1404 = vmul.f32 %v1332, %v1380
    %v1405 = vmul.f32 %v1333, %v1381
    %v1406 = vmul.f32 %v1334, %v1382
    %v1407 = vmul.f32 %v1335, %v1383
    %v1408 = vmul.f32 %v1336, %v1384
    %v1409 = vmul.f32 %v1337, %v1385
    %v1410 = vmul.f32 %v1338, %v1386
    %v1411 = vmul.f32 %v1339, %v1387
    %v1412 = vmul.f32 %v1340, %v1388
    %v1413 = vmul.f32 %v1341, %v1389
    %v1414 = vld [vmem:[%s3] sm:$0xff]
    %v1415 = vld [vmem:[%s3 + $0x8] sm:$0xff]
    %v1416 = vld [vmem:[%s3 + $0x10] sm:$0xff]
    %v1417 = vld [vmem:[%s3 + $0x18] sm:$0xff]
    %v1418 = vld [vmem:[%s3 + $0x20] sm:$0xff]
    %v1419 = vld [vmem:[%s3 + $0x28] sm:$0xff]
    %v1420 = vld [vmem:[%s3 + $0x30] sm:$0xff]
    %v1421 = vld [vmem:[%s3 + $0x38] sm:$0xff]
    %v1422 = vld [vmem:[%s3 + $0x40] sm:$0xff]
    %v1423 = vld [vmem:[%s3 + $0x48] sm:$0xff]
    %v1424 = vld [vmem:[%s3 + $0x50] sm:$0xff]
    %v1425 = vld [vmem:[%s3 + $0x58] sm:$0xff]
    %v1426 = vld [vmem:[%s3 + $0x60] sm:$0xff]
    %v1427 = vld [vmem:[%s3 + $0x68] sm:$0xff]
    %v1428 = vld [vmem:[%s3 + $0x70] sm:$0xff]
    %v1429 = vld [vmem:[%s3 + $0x78] sm:$0xff]
    %v1430 = vld [vmem:[%s3 + $0x80] sm:$0xff]
    %v1431 = vld [vmem:[%s3 + $0x88] sm:$0xff]
    %v1432 = vld [vmem:[%s3 + $0x90] sm:$0xff]
    %v1433 = vld [vmem:[%s3 + $0x98] sm:$0xff]
    %v1434 = vld [vmem:[%s3 + $0xa0] sm:$0xff]
    %v1435 = vld [vmem:[%s3 + $0xa8] sm:$0xff]
    %v1436 = vld [vmem:[%s3 + $0xb0] sm:$0xff]
    %v1437 = vld [vmem:[%s3 + $0xb8] sm:$0xff]
    %v1438 = vmul.f32 %v1222, %v1390
    %v1439 = vmul.f32 %v1223, %v1391
    %v1440 = vmul.f32 %v1224, %v1392
    %v1441 = vmul.f32 %v1225, %v1393
    %v1442 = vmul.f32 %v1226, %v1394
    %v1443 = vmul.f32 %v1227, %v1395
    %v1444 = vmul.f32 %v1228, %v1396
    %v1445 = vmul.f32 %v1229, %v1397
    %v1446 = vmul.f32 %v1230, %v1398
    %v1447 = vmul.f32 %v1231, %v1399
    %v1448 = vmul.f32 %v1232, %v1400
    %v1449 = vmul.f32 %v1233, %v1401
    %v1450 = vmul.f32 %v1234, %v1402
    %v1451 = vmul.f32 %v1235, %v1403
    %v1452 = vmul.f32 %v1236, %v1404
    %v1453 = vmul.f32 %v1237, %v1405
    %v1454 = vmul.f32 %v1238, %v1406
    %v1455 = vmul.f32 %v1239, %v1407
    %v1456 = vmul.f32 %v1240, %v1408
    %v1457 = vmul.f32 %v1241, %v1409
    %v1458 = vmul.f32 %v1242, %v1410
    %v1459 = vmul.f32 %v1243, %v1411
    %v1460 = vmul.f32 %v1244, %v1412
    %v1461 = vmul.f32 %v1245, %v1413
    %v1462 = vsub.f32 %v1414, %v1438
    %v1463 = vsub.f32 %v1415, %v1439
    %v1464 = vsub.f32 %v1416, %v1440
    %v1465 = vsub.f32 %v1417, %v1441
    %v1466 = vsub.f32 %v1418, %v1442
    %v1467 = vsub.f32 %v1419, %v1443
    %v1468 = vsub.f32 %v1420, %v1444
    %v1469 = vsub.f32 %v1421, %v1445
    %v1470 = vsub.f32 %v1422, %v1446
    %v1471 = vsub.f32 %v1423, %v1447
    %v1472 = vsub.f32 %v1424, %v1448
    %v1473 = vsub.f32 %v1425, %v1449
    %v1474 = vsub.f32 %v1426, %v1450
    %v1475 = vsub.f32 %v1427, %v1451
    %v1476 = vsub.f32 %v1428, %v1452
    %v1477 = vsub.f32 %v1429, %v1453
    %v1478 = vsub.f32 %v1430, %v1454
    %v1479 = vsub.f32 %v1431, %v1455
    %v1480 = vsub.f32 %v1432, %v1456
    %v1481 = vsub.f32 %v1433, %v1457
    %v1482 = vsub.f32 %v1434, %v1458
    %v1483 = vsub.f32 %v1435, %v1459
    %v1484 = vsub.f32 %v1436, %v1460
    %v1485 = vsub.f32 %v1437, %v1461
    %1487 = vset.pattern.permute.xlu0 0
    %1488 = vperm.xlu0 %1487, %v1390
    %v1489 = vpop.permute.xlu0 %1488
    %1492 = vset.pattern.permute.xlu0 0
    %1493 = vperm.xlu0 %1492, %v1391
    %v1494 = vpop.permute.xlu0 %1493
    %1497 = vset.pattern.permute.xlu0 0
    %1498 = vperm.xlu0 %1497, %v1392
    %v1499 = vpop.permute.xlu0 %1498
    %1502 = vset.pattern.permute.xlu0 0
    %1503 = vperm.xlu0 %1502, %v1393
    %v1504 = vpop.permute.xlu0 %1503
    %1507 = vset.pattern.permute.xlu0 0
    %1508 = vperm.xlu0 %1507, %v1394
    %v1509 = vpop.permute.xlu0 %1508
    %1512 = vset.pattern.permute.xlu0 0
    %1513 = vperm.xlu0 %1512, %v1395
    %v1514 = vpop.permute.xlu0 %1513
    %1517 = vset.pattern.permute.xlu0 0
    %1518 = vperm.xlu0 %1517, %v1396
    %v1519 = vpop.permute.xlu0 %1518
    %1522 = vset.pattern.permute.xlu0 0
    %1523 = vperm.xlu0 %1522, %v1397
    %v1524 = vpop.permute.xlu0 %1523
    %1527 = vset.pattern.permute.xlu0 0
    %1528 = vperm.xlu0 %1527, %v1398
    %v1529 = vpop.permute.xlu0 %1528
    %1532 = vset.pattern.permute.xlu0 0
    %1533 = vperm.xlu0 %1532, %v1399
    %v1534 = vpop.permute.xlu0 %1533
    %1537 = vset.pattern.permute.xlu0 0
    %1538 = vperm.xlu0 %1537, %v1400
    %v1539 = vpop.permute.xlu0 %1538
    %1542 = vset.pattern.permute.xlu0 0
    %1543 = vperm.xlu0 %1542, %v1401
    %v1544 = vpop.permute.xlu0 %1543
    %1547 = vset.pattern.permute.xlu0 0
    %1548 = vperm.xlu0 %1547, %v1402
    %v1549 = vpop.permute.xlu0 %1548
    %1552 = vset.pattern.permute.xlu0 0
    %1553 = vperm.xlu0 %1552, %v1403
    %v1554 = vpop.permute.xlu0 %1553
    %1557 = vset.pattern.permute.xlu0 0
    %1558 = vperm.xlu0 %1557, %v1404
    %v1559 = vpop.permute.xlu0 %1558
    %1562 = vset.pattern.permute.xlu0 0
    %1563 = vperm.xlu0 %1562, %v1405
    %v1564 = vpop.permute.xlu0 %1563
    %1567 = vset.pattern.permute.xlu0 0
    %1568 = vperm.xlu0 %1567, %v1406
    %v1569 = vpop.permute.xlu0 %1568
    %1572 = vset.pattern.permute.xlu0 0
    %1573 = vperm.xlu0 %1572, %v1407
    %v1574 = vpop.permute.xlu0 %1573
    %1577 = vset.pattern.permute.xlu0 0
    %1578 = vperm.xlu0 %1577, %v1408
    %v1579 = vpop.permute.xlu0 %1578
    %1582 = vset.pattern.permute.xlu0 0
    %1583 = vperm.xlu0 %1582, %v1409
    %v1584 = vpop.permute.xlu0 %1583
    %1587 = vset.pattern.permute.xlu0 0
    %1588 = vperm.xlu0 %1587, %v1410
    %v1589 = vpop.permute.xlu0 %1588
    %1592 = vset.pattern.permute.xlu0 0
    %1593 = vperm.xlu0 %1592, %v1411
    %v1594 = vpop.permute.xlu0 %1593
    %1597 = vset.pattern.permute.xlu0 0
    %1598 = vperm.xlu0 %1597, %v1412
    %v1599 = vpop.permute.xlu0 %1598
    %1602 = vset.pattern.permute.xlu0 0
    %1603 = vperm.xlu0 %1602, %v1413
    %v1604 = vpop.permute.xlu0 %1603
    %v1606 = vmul.f32 %v839, %v1489
    %v1607 = vmul.f32 %v841, %v1489
    %v1608 = vmul.f32 %v845, %v1494
    %v1609 = vmul.f32 %v847, %v1494
    %v1610 = vmul.f32 %v851, %v1499
    %v1611 = vmul.f32 %v853, %v1499
    %v1612 = vmul.f32 %v857, %v1504
    %v1613 = vmul.f32 %v859, %v1504
    %v1614 = vmul.f32 %v863, %v1509
    %v1615 = vmul.f32 %v865, %v1509
    %v1616 = vmul.f32 %v869, %v1514
    %v1617 = vmul.f32 %v871, %v1514
    %v1618 = vmul.f32 %v875, %v1519
    %v1619 = vmul.f32 %v877, %v1519
    %v1620 = vmul.f32 %v881, %v1524
    %v1621 = vmul.f32 %v883, %v1524
    %v1622 = vmul.f32 %v887, %v1529
    %v1623 = vmul.f32 %v889, %v1529
    %v1624 = vmul.f32 %v893, %v1534
    %v1625 = vmul.f32 %v895, %v1534
    %v1626 = vmul.f32 %v899, %v1539
    %v1627 = vmul.f32 %v901, %v1539
    %v1628 = vmul.f32 %v905, %v1544
    %v1629 = vmul.f32 %v907, %v1544
    %v1630 = vmul.f32 %v911, %v1549
    %v1631 = vmul.f32 %v913, %v1549
    %v1632 = vmul.f32 %v917, %v1554
    %v1633 = vmul.f32 %v919, %v1554
    %v1634 = vmul.f32 %v923, %v1559
    %v1635 = vmul.f32 %v925, %v1559
    %v1636 = vmul.f32 %v929, %v1564
    %v1637 = vmul.f32 %v931, %v1564
    %v1638 = vmul.f32 %v935, %v1569
    %v1639 = vmul.f32 %v937, %v1569
    %v1640 = vmul.f32 %v941, %v1574
    %v1641 = vmul.f32 %v943, %v1574
    %v1642 = vmul.f32 %v947, %v1579
    %v1643 = vmul.f32 %v949, %v1579
    %v1644 = vmul.f32 %v953, %v1584
    %v1645 = vmul.f32 %v955, %v1584
    %v1646 = vmul.f32 %v959, %v1589
    %v1647 = vmul.f32 %v961, %v1589
    %v1648 = vmul.f32 %v965, %v1594
    %v1649 = vmul.f32 %v967, %v1594
    %v1650 = vmul.f32 %v971, %v1599
    %v1651 = vmul.f32 %v973, %v1599
    %v1652 = vmul.f32 %v977, %v1604
    %v1653 = vmul.f32 %v979, %v1604
    %1655 = vset.pattern.permute.xlu0 0
    %1656 = vperm.xlu0 %1655, %v1462
    %v1657 = vpop.permute.xlu0 %1656
    %1660 = vset.pattern.permute.xlu0 0
    %1661 = vperm.xlu0 %1660, %v1463
    %v1662 = vpop.permute.xlu0 %1661
    %1665 = vset.pattern.permute.xlu0 0
    %1666 = vperm.xlu0 %1665, %v1464
    %v1667 = vpop.permute.xlu0 %1666
    %1670 = vset.pattern.permute.xlu0 0
    %1671 = vperm.xlu0 %1670, %v1465
    %v1672 = vpop.permute.xlu0 %1671
    %1675 = vset.pattern.permute.xlu0 0
    %1676 = vperm.xlu0 %1675, %v1466
    %v1677 = vpop.permute.xlu0 %1676
    %1680 = vset.pattern.permute.xlu0 0
    %1681 = vperm.xlu0 %1680, %v1467
    %v1682 = vpop.permute.xlu0 %1681
    %1685 = vset.pattern.permute.xlu0 0
    %1686 = vperm.xlu0 %1685, %v1468
    %v1687 = vpop.permute.xlu0 %1686
    %1690 = vset.pattern.permute.xlu0 0
    %1691 = vperm.xlu0 %1690, %v1469
    %v1692 = vpop.permute.xlu0 %1691
    %1695 = vset.pattern.permute.xlu0 0
    %1696 = vperm.xlu0 %1695, %v1470
    %v1697 = vpop.permute.xlu0 %1696
    %1700 = vset.pattern.permute.xlu0 0
    %1701 = vperm.xlu0 %1700, %v1471
    %v1702 = vpop.permute.xlu0 %1701
    %1705 = vset.pattern.permute.xlu0 0
    %1706 = vperm.xlu0 %1705, %v1472
    %v1707 = vpop.permute.xlu0 %1706
    %1710 = vset.pattern.permute.xlu0 0
    %1711 = vperm.xlu0 %1710, %v1473
    %v1712 = vpop.permute.xlu0 %1711
    %1715 = vset.pattern.permute.xlu0 0
    %1716 = vperm.xlu0 %1715, %v1474
    %v1717 = vpop.permute.xlu0 %1716
    %1720 = vset.pattern.permute.xlu0 0
    %1721 = vperm.xlu0 %1720, %v1475
    %v1722 = vpop.permute.xlu0 %1721
    %1725 = vset.pattern.permute.xlu0 0
    %1726 = vperm.xlu0 %1725, %v1476
    %v1727 = vpop.permute.xlu0 %1726
    %1730 = vset.pattern.permute.xlu0 0
    %1731 = vperm.xlu0 %1730, %v1477
    %v1732 = vpop.permute.xlu0 %1731
    %1735 = vset.pattern.permute.xlu0 0
    %1736 = vperm.xlu0 %1735, %v1478
    %v1737 = vpop.permute.xlu0 %1736
    %1740 = vset.pattern.permute.xlu0 0
    %1741 = vperm.xlu0 %1740, %v1479
    %v1742 = vpop.permute.xlu0 %1741
    %1745 = vset.pattern.permute.xlu0 0
    %1746 = vperm.xlu0 %1745, %v1480
    %v1747 = vpop.permute.xlu0 %1746
    %1750 = vset.pattern.permute.xlu0 0
    %1751 = vperm.xlu0 %1750, %v1481
    %v1752 = vpop.permute.xlu0 %1751
    %1755 = vset.pattern.permute.xlu0 0
    %1756 = vperm.xlu0 %1755, %v1482
    %v1757 = vpop.permute.xlu0 %1756
    %1760 = vset.pattern.permute.xlu0 0
    %1761 = vperm.xlu0 %1760, %v1483
    %v1762 = vpop.permute.xlu0 %1761
    %1765 = vset.pattern.permute.xlu0 0
    %1766 = vperm.xlu0 %1765, %v1484
    %v1767 = vpop.permute.xlu0 %1766
    %1770 = vset.pattern.permute.xlu0 0
    %1771 = vperm.xlu0 %1770, %v1485
    %v1772 = vpop.permute.xlu0 %1771
    %v1774 = vadd.f32 %v1606, %v1657
    %v1775 = vadd.f32 %v1607, %v1657
    %v1776 = vadd.f32 %v1608, %v1662
    %v1777 = vadd.f32 %v1609, %v1662
    %v1778 = vadd.f32 %v1610, %v1667
    %v1779 = vadd.f32 %v1611, %v1667
    %v1780 = vadd.f32 %v1612, %v1672
    %v1781 = vadd.f32 %v1613, %v1672
    %v1782 = vadd.f32 %v1614, %v1677
    %v1783 = vadd.f32 %v1615, %v1677
    %v1784 = vadd.f32 %v1616, %v1682
    %v1785 = vadd.f32 %v1617, %v1682
    %v1786 = vadd.f32 %v1618, %v1687
    %v1787 = vadd.f32 %v1619, %v1687
    %v1788 = vadd.f32 %v1620, %v1692
    %v1789 = vadd.f32 %v1621, %v1692
    %v1790 = vadd.f32 %v1622, %v1697
    %v1791 = vadd.f32 %v1623, %v1697
    %v1792 = vadd.f32 %v1624, %v1702
    %v1793 = vadd.f32 %v1625, %v1702
    %v1794 = vadd.f32 %v1626, %v1707
    %v1795 = vadd.f32 %v1627, %v1707
    %v1796 = vadd.f32 %v1628, %v1712
    %v1797 = vadd.f32 %v1629, %v1712
    %v1798 = vadd.f32 %v1630, %v1717
    %v1799 = vadd.f32 %v1631, %v1717
    %v1800 = vadd.f32 %v1632, %v1722
    %v1801 = vadd.f32 %v1633, %v1722
    %v1802 = vadd.f32 %v1634, %v1727
    %v1803 = vadd.f32 %v1635, %v1727
    %v1804 = vadd.f32 %v1636, %v1732
    %v1805 = vadd.f32 %v1637, %v1732
    %v1806 = vadd.f32 %v1638, %v1737
    %v1807 = vadd.f32 %v1639, %v1737
    %v1808 = vadd.f32 %v1640, %v1742
    %v1809 = vadd.f32 %v1641, %v1742
    %v1810 = vadd.f32 %v1642, %v1747
    %v1811 = vadd.f32 %v1643, %v1747
    %v1812 = vadd.f32 %v1644, %v1752
    %v1813 = vadd.f32 %v1645, %v1752
    %v1814 = vadd.f32 %v1646, %v1757
    %v1815 = vadd.f32 %v1647, %v1757
    %v1816 = vadd.f32 %v1648, %v1762
    %v1817 = vadd.f32 %v1649, %v1762
    %v1818 = vadd.f32 %v1650, %v1767
    %v1819 = vadd.f32 %v1651, %v1767
    %v1820 = vadd.f32 %v1652, %v1772
    %v1821 = vadd.f32 %v1653, %v1772
    %1822 = vst [vmem:[#allocation2] sm:$0xff] %v1774
    %1823 = vst.msk [vmem:[#allocation2 + $0x8] sm:$0xff] %vm981, %v1775
    %1824 = vst [vmem:[#allocation2 + $0x10] sm:$0xff] %v1776
    %1825 = vst.msk [vmem:[#allocation2 + $0x18] sm:$0xff] %vm981, %v1777
    %1826 = vst [vmem:[#allocation2 + $0x20] sm:$0xff] %v1778
    %1827 = vst.msk [vmem:[#allocation2 + $0x28] sm:$0xff] %vm981, %v1779
    %1828 = vst [vmem:[#allocation2 + $0x30] sm:$0xff] %v1780
    %1829 = vst.msk [vmem:[#allocation2 + $0x38] sm:$0xff] %vm981, %v1781
    %1830 = vst [vmem:[#allocation2 + $0x40] sm:$0xff] %v1782
    %1831 = vst.msk [vmem:[#allocation2 + $0x48] sm:$0xff] %vm981, %v1783
    %1832 = vst [vmem:[#allocation2 + $0x50] sm:$0xff] %v1784
    %1833 = vst.msk [vmem:[#allocation2 + $0x58] sm:$0xff] %vm981, %v1785
    %1834 = vst [vmem:[#allocation2 + $0x60] sm:$0xff] %v1786
    %1835 = vst.msk [vmem:[#allocation2 + $0x68] sm:$0xff] %vm981, %v1787
    %1836 = vst [vmem:[#allocation2 + $0x70] sm:$0xff] %v1788
    %1837 = vst.msk [vmem:[#allocation2 + $0x78] sm:$0xff] %vm981, %v1789
    %1838 = vst [vmem:[#allocation2 + $0x80] sm:$0xff] %v1790
    %1839 = vst.msk [vmem:[#allocation2 + $0x88] sm:$0xff] %vm981, %v1791
    %1840 = vst [vmem:[#allocation2 + $0x90] sm:$0xff] %v1792
    %1841 = vst.msk [vmem:[#allocation2 + $0x98] sm:$0xff] %vm981, %v1793
    %1842 = vst [vmem:[#allocation2 + $0xa0] sm:$0xff] %v1794
    %1843 = vst.msk [vmem:[#allocation2 + $0xa8] sm:$0xff] %vm981, %v1795
    %1844 = vst [vmem:[#allocation2 + $0xb0] sm:$0xff] %v1796
    %1845 = vst.msk [vmem:[#allocation2 + $0xb8] sm:$0xff] %vm981, %v1797
    %1846 = vst [vmem:[#allocation2 + $0xc0] sm:$0xff] %v1798
    %1847 = vst.msk [vmem:[#allocation2 + $0xc8] sm:$0xff] %vm981, %v1799
    %1848 = vst [vmem:[#allocation2 + $0xd0] sm:$0xff] %v1800
    %1849 = vst.msk [vmem:[#allocation2 + $0xd8] sm:$0xff] %vm981, %v1801
    %1850 = vst [vmem:[#allocation2 + $0xe0] sm:$0xff] %v1802
    %1851 = vst.msk [vmem:[#allocation2 + $0xe8] sm:$0xff] %vm981, %v1803
    %1852 = vst [vmem:[#allocation2 + $0xf0] sm:$0xff] %v1804
    %1853 = vst.msk [vmem:[#allocation2 + $0xf8] sm:$0xff] %vm981, %v1805
    %1854 = vst [vmem:[#allocation2 + $0x100] sm:$0xff] %v1806
    %1855 = vst.msk [vmem:[#allocation2 + $0x108] sm:$0xff] %vm981, %v1807
    %1856 = vst [vmem:[#allocation2 + $0x110] sm:$0xff] %v1808
    %1857 = vst.msk [vmem:[#allocation2 + $0x118] sm:$0xff] %vm981, %v1809
    %1858 = vst [vmem:[#allocation2 + $0x120] sm:$0xff] %v1810
    %1859 = vst.msk [vmem:[#allocation2 + $0x128] sm:$0xff] %vm981, %v1811
    %1860 = vst [vmem:[#allocation2 + $0x130] sm:$0xff] %v1812
    %1861 = vst.msk [vmem:[#allocation2 + $0x138] sm:$0xff] %vm981, %v1813
    %1862 = vst [vmem:[#allocation2 + $0x140] sm:$0xff] %v1814
    %1863 = vst.msk [vmem:[#allocation2 + $0x148] sm:$0xff] %vm981, %v1815
    %1864 = vst [vmem:[#allocation2 + $0x150] sm:$0xff] %v1816
    %1865 = vst.msk [vmem:[#allocation2 + $0x158] sm:$0xff] %vm981, %v1817
    %1866 = vst [vmem:[#allocation2 + $0x160] sm:$0xff] %v1818
    %1867 = vst.msk [vmem:[#allocation2 + $0x168] sm:$0xff] %vm981, %v1819
    %1868 = vst [vmem:[#allocation2 + $0x170] sm:$0xff] %v1820
    %1869 = vst.msk [vmem:[#allocation2 + $0x178] sm:$0xff] %vm981, %v1821
    // Predicated region
    $region18: #{tpu_custom_call.1} parent=1 // pred_check
      _
    $region19: #{tpu_custom_call.1} parent=1 // pred_check_branch
      %1871 = sbr.rel (0) target = $region21
    $region20: #{tpu_custom_call.1} parent=1 // pred_region
      %s1873 = ssub.s32 6144, 6144
      %1874 = vsyncadd [#allocation3], %s1873
      %s1875 = sshll.u32 [#allocation2], 4
      %s1876 = int_to_ptr.vmem [resolvable:$true] %s1875
      %1881 = dma.vmem_to_hbm [thread:$0]  %s1876, 6144, %s4, [#allocation3], 256, 256, 16
    $region21: #{tpu_custom_call.1} parent=1 // pred_fallthru
      _
    // Predicated region
    $region22: #{tpu_custom_call.1} parent=1 // pred_check
      _
    $region23: #{tpu_custom_call.1} parent=1 // pred_check_branch
      %1883 = sbr.rel (0) target = $region25
    $region24: #{tpu_custom_call.1} parent=1 // pred_region
      %1884 = dma.done [#allocation3], 6144
    $region25: #{tpu_custom_call.1} parent=1 // pred_fallthru
      _
    %1885 = vsyncpa [#allocation3], 1

</llo_original>
